<compile_context>
chip_gen: v7x
topology: tpu7x:2x2x1
jax: 0.10.0
libtpu: 0.0.40
codegen_flags: <defaults>
</compile_context>

<pallas_src>
import functools

import jax
import jax.numpy as jnp
from jax.experimental import pallas as pl
from jax.experimental.pallas import tpu as pltpu

NUM_REPEAT = 2  # ResidualBlockNd(numRepeat=2, ...)


def _conv3x3_circular(x_flat, w_im2col, bias_full, first_col, last_col,
                      patches_ref, *, W):
    """3x3 stride-1 circularly-padded conv on a lane-dense (C, H*W) layout.

    x_flat:      (C, P) f32, column p = h*W + w   (C = padded channel count)
    w_im2col:    (C, 9*C) f32, column (kh*3 + kw)*C + ci
    bias_full:   (C, P) f32 (pre-broadcast, hoisted by caller)
    first_col / last_col: (C, P) bool masks for w == 0 / w == W-1
    patches_ref: VMEM scratch (9*C, P) f32
    returns:     (C, P) f32
    """
    C, P = x_flat.shape

    def rot(arr, s):  # rot(arr, s)[c, p] == arr[c, (p + s) % P]
        sh = (-s) % P
        return arr if sh == 0 else pltpu.roll(arr, shift=sh, axis=1)

    # Column wrap fixed ONCE per column shift (2 full-tile selects per conv).
    y_minus = jnp.where(first_col, rot(x_flat, W - 1), rot(x_flat, -1))  # w-1
    y_plus = jnp.where(last_col, rot(x_flat, 1 - W), rot(x_flat, 1))     # w+1
    cols = (y_minus, x_flat, y_plus)                                     # dw=-1,0,+1

    # Row wrap is exact under a flat roll because the block holds the whole
    # H*W plane (roll modulus == H*W).  Stage each tap at a sublane-aligned
    # offset in VMEM scratch: cheap aligned vst, ~one tap live at a time.
    # TODO(synk): if H*W is ever tiled into row bands, replace the flat-roll
    # row wrap with an explicit 1-row circular halo per band.
    k = 0
    for dh in (-1, 0, 1):            # kh - 1
        for y in cols:               # kw - 1 = -1, 0, +1
            patches_ref[pl.ds(k * C, C), :] = rot(y, dh * W)
            k += 1

    out = jnp.dot(w_im2col, patches_ref[...],
                  preferred_element_type=jnp.float32)
    return out + bias_full


def _resblock_kernel(x_ref, w1_ref, b1_ref, w2_ref, b2_ref, o_ref,
                     patches_ref, *, num_repeat, W):
    Nb, C, P = x_ref.shape

    w1 = w1_ref[...]                                     # (C, 9*C) resident
    w2 = w2_ref[...]

    # Hoisted once: bias broadcasts + circular-wrap column masks, shared by
    # all conv applications of the unrolled repeat loop and all samples.
    b1 = jnp.broadcast_to(b1_ref[...], (C, P))
    b2 = jnp.broadcast_to(b2_ref[...], (C, P))
    col = jax.lax.broadcasted_iota(jnp.int32, (C, P), 1) % W
    first_col = col == 0
    last_col = col == W - 1

    for n in range(Nb):                                  # static unroll over samples
        x = x_ref[n].astype(jnp.float32)                 # (C, P)
        for _ in range(num_repeat):                      # weights shared across repeats
            residual = x
            h = jnp.maximum(
                _conv3x3_circular(x, w1, b1, first_col, last_col,
                                  patches_ref, W=W), 0.0)
            h = _conv3x3_circular(h, w2, b2, first_col, last_col,
                                  patches_ref, W=W)
            x = jnp.maximum(h + residual, 0.0)           # identity shortcut + ReLU
        o_ref[n] = x.astype(o_ref.dtype)


def _tensorcores_per_chip():
    try:
        kind = jax.devices()[0].device_kind.lower()
    except Exception:
        return 1
    # v7x has 2 TensorCores per chip; v5e/v6e have 1.
    return 2 if ("v7" in kind or "7x" in kind) else 1


def residual_block_nd(x_nchw, w1, b1, w2, b2, num_repeat=NUM_REPEAT):
    """Forward of ResidualBlockNd. x_nchw: (N, C, H, W); weights torch OIHW."""
    N, C, H, W = x_nchw.shape
    P = H * W
    C_pad = max(8, -(-C // 8) * 8)        # sublane-align the channel dim (f32)
    pad_c = C_pad - C

    x_flat = x_nchw.reshape(N, C, P)      # free reshape, stays NCHW-contiguous
    if pad_c:
        x_flat = jnp.pad(x_flat, ((0, 0), (0, pad_c), (0, 0)))

    def im2col_w(w):                      # torch OIHW -> (C_pad, 9*C_pad)
        w = w.astype(jnp.float32)
        if pad_c:
            w = jnp.pad(w, ((0, pad_c), (0, pad_c), (0, 0), (0, 0)))
        return jnp.transpose(w, (0, 2, 3, 1)).reshape(C_pad, 9 * C_pad)

    def pad_bias(b):
        b = b.astype(jnp.float32)
        if pad_c:
            b = jnp.pad(b, (0, pad_c))
        return b.reshape(C_pad, 1)

    wm1, wm2 = im2col_w(w1), im2col_w(w2)
    b1c, b2c = pad_bias(b1), pad_bias(b2)

    # Grid choice: overhead-bound kernel -> single step with the whole batch
    # on single-TC chips; one sample per step ("parallel") on multi-TC chips.
    if _tensorcores_per_chip() >= 2 and N >= 2:
        grid, blk_n, sem = (N,), 1, ("parallel",)
    else:
        grid, blk_n, sem = (1,), N, ("arbitrary",)

    out_flat = pl.pallas_call(
        functools.partial(_resblock_kernel, num_repeat=num_repeat, W=W),
        out_shape=jax.ShapeDtypeStruct((N, C_pad, P), x_nchw.dtype),
        grid=grid,
        in_specs=[
            pl.BlockSpec((blk_n, C_pad, P), lambda n: (n, 0, 0)),   # x block
            pl.BlockSpec((C_pad, 9 * C_pad), lambda n: (0, 0)),     # w1 (resident)
            pl.BlockSpec((C_pad, 1), lambda n: (0, 0)),             # b1
            pl.BlockSpec((C_pad, 9 * C_pad), lambda n: (0, 0)),     # w2
            pl.BlockSpec((C_pad, 1), lambda n: (0, 0)),             # b2
        ],
        out_specs=pl.BlockSpec((blk_n, C_pad, P), lambda n: (n, 0, 0)),
        scratch_shapes=[pltpu.VMEM((9 * C_pad, P), jnp.float32)],   # im2col patches
        compiler_params=pltpu.CompilerParams(dimension_semantics=sem),
    )(x_flat, wm1, b1c, wm2, b2c)

    return out_flat[:, :C, :].reshape(N, C, H, W)


# -------------------- pure-JAX reference (for verification) --------------------
def _ref_conv(x_nchw, w, b):
    xp = jnp.pad(x_nchw, ((0, 0), (0, 0), (1, 1), (1, 1)), mode="wrap")  # circular
    out = jax.lax.conv_general_dilated(
        xp, w, window_strides=(1, 1), padding="VALID",
        dimension_numbers=("NCHW", "OIHW", "NCHW"))
    return out + b.reshape(1, -1, 1, 1)


def _ref_forward(x, w1, b1, w2, b2, num_repeat=NUM_REPEAT):
    for _ in range(num_repeat):
        res = x
        x = jnp.maximum(_ref_conv(x, w1, b1), 0.0)
        x = _ref_conv(x, w2, b2)
        x = jnp.maximum(x + res, 0.0)
    return x


if __name__ == "__main__":
    N, C, H, W = 2, 4, 16, 16                 # in_channels == out_channels == 4
    key = jax.random.PRNGKey(0)
    kx, kw1, kb1, kw2, kb2 = jax.random.split(key, 5)

    x = jax.random.normal(kx, (N, C, H, W), dtype=jnp.float32)

    # Deterministic init mimicking torch Conv2d default (uniform, bound=1/sqrt(fan_in))
    fan_in = C * 3 * 3
    bound = 1.0 / (fan_in ** 0.5)
    w1 = jax.random.uniform(kw1, (C, C, 3, 3), jnp.float32, -bound, bound)
    b1 = jax.random.uniform(kb1, (C,), jnp.float32, -bound, bound)
    w2 = jax.random.uniform(kw2, (C, C, 3, 3), jnp.float32, -bound, bound)
    b2 = jax.random.uniform(kb2, (C,), jnp.float32, -bound, bound)

    out = residual_block_nd(x, w1, b1, w2, b2)
    out = jax.block_until_ready(out)

    ref = _ref_forward(x, w1, b1, w2, b2)
    assert out.shape == (N, C, H, W)
    assert jnp.allclose(out, ref, rtol=1e-4, atol=1e-4), "mismatch vs JAX reference"

    print("KERNEL_OK")
</pallas_src>

<mosaic_0001>
module attributes {stable_mosaic.version = 11 : i64} {
  func.func @_resblock_kernel(%arg0: i32, %arg1: memref<2x8x256xf32, #tpu.memory_space<vmem>>, %arg2: memref<8x72xf32, #tpu.memory_space<vmem>>, %arg3: memref<8x1xf32, #tpu.memory_space<vmem>>, %arg4: memref<8x72xf32, #tpu.memory_space<vmem>>, %arg5: memref<8x1xf32, #tpu.memory_space<vmem>>, %arg6: memref<2x8x256xf32, #tpu.memory_space<vmem>>, %arg7: memref<72x256xf32, #tpu.memory_space<vmem>>) attributes {dimension_semantics = [#tpu.dimension_semantics<arbitrary>], iteration_bounds = array<i64: 1>, scalar_prefetch = 0 : i64, scratch_operands = 1 : i64, tpu.core_type = #tpu.core_type<tc>, window_params = [{transform_indices = @transform_0, window_bounds = array<i64: 2, 8, 256>}, {pipeline_mode = #tpu.pipeline_mode<synchronous>, transform_indices = @transform_1, window_bounds = array<i64: 8, 72>}, {pipeline_mode = #tpu.pipeline_mode<synchronous>, transform_indices = @transform_2, window_bounds = array<i64: 8, 1>}, {pipeline_mode = #tpu.pipeline_mode<synchronous>, transform_indices = @transform_3, window_bounds = array<i64: 8, 72>}, {pipeline_mode = #tpu.pipeline_mode<synchronous>, transform_indices = @transform_4, window_bounds = array<i64: 8, 1>}, {transform_indices = @transform_5, window_bounds = array<i64: 2, 8, 256>}]} {
    %c0 = arith.constant 0 : index
    %c0_0 = arith.constant 0 : index
    %0 = vector.load %arg2[%c0, %c0_0] : memref<8x72xf32, #tpu.memory_space<vmem>>, vector<8x72xf32>
    %c0_1 = arith.constant 0 : index
    %c0_2 = arith.constant 0 : index
    %1 = vector.load %arg4[%c0_1, %c0_2] : memref<8x72xf32, #tpu.memory_space<vmem>>, vector<8x72xf32>
    %c0_3 = arith.constant 0 : index
    %c0_4 = arith.constant 0 : index
    %2 = vector.load %arg3[%c0_3, %c0_4] : memref<8x1xf32, #tpu.memory_space<vmem>>, vector<8x1xf32>
    %3 = vector.shape_cast %2 : vector<8x1xf32> to vector<8x1xf32>
    %4 = vector.broadcast %3 : vector<8x1xf32> to vector<8x256xf32>
    %c0_5 = arith.constant 0 : index
    %c0_6 = arith.constant 0 : index
    %5 = vector.load %arg5[%c0_5, %c0_6] : memref<8x1xf32, #tpu.memory_space<vmem>>, vector<8x1xf32>
    %6 = vector.shape_cast %5 : vector<8x1xf32> to vector<8x1xf32>
    %7 = vector.broadcast %6 : vector<8x1xf32> to vector<8x256xf32>
    %8 = tpu.iota {dimensions = array<i32: 1>} : vector<8x256xi32>
    %c16_i32 = arith.constant 16 : i32
    %c0_i32 = arith.constant 0 : i32
    %9 = arith.cmpi eq, %c16_i32, %c0_i32 : i32
    %c1_i32 = arith.constant 1 : i32
    %10 = arith.select %9, %c1_i32, %c16_i32 : i32
    %11 = vector.broadcast %10 : i32 to vector<8x256xi32>
    %12 = arith.remsi %8, %11 : vector<8x256xi32>
    %c0_i32_7 = arith.constant 0 : i32
    %13 = vector.broadcast %c0_i32_7 : i32 to vector<8x256xi32>
    %14 = arith.cmpi ne, %12, %13 : vector<8x256xi32>
    %c0_i32_8 = arith.constant 0 : i32
    %15 = vector.broadcast %c0_i32_8 : i32 to vector<8x256xi32>
    %16 = arith.cmpi slt, %12, %15 : vector<8x256xi32>
    %c0_i32_9 = arith.constant 0 : i32
    %17 = arith.cmpi slt, %10, %c0_i32_9 : i32
    %18 = vector.broadcast %17 : i1 to vector<8x256xi1>
    %19 = vector.broadcast %18 : vector<8x256xi1> to vector<8x256xi1>
    %20 = arith.xori %16, %19 : vector<8x256xi1>
    %21 = arith.andi %20, %14 : vector<8x256xi1>
    %22 = vector.broadcast %10 : i32 to vector<8x256xi32>
    %23 = arith.addi %12, %22 : vector<8x256xi32>
    %24 = arith.select %21, %23, %12 : vector<8x256xi1>, vector<8x256xi32>
    %c0_i32_10 = arith.constant 0 : i32
    %25 = vector.broadcast %c0_i32_10 : i32 to vector<8x256xi32>
    %26 = arith.cmpi eq, %24, %25 : vector<8x256xi32>
    %c15_i32 = arith.constant 15 : i32
    %27 = vector.broadcast %c15_i32 : i32 to vector<8x256xi32>
    %28 = arith.cmpi eq, %24, %27 : vector<8x256xi32>
    %c0_11 = arith.constant 0 : index
    %c0_12 = arith.constant 0 : index
    %c0_13 = arith.constant 0 : index
    %29 = vector.load %arg1[%c0_11, %c0_12, %c0_13] : memref<2x8x256xf32, #tpu.memory_space<vmem>>, vector<1x8x256xf32>
    %30 = vector.shape_cast %29 : vector<1x8x256xf32> to vector<8x256xf32>
    %c241_i32 = arith.constant 241 : i32
    %31 = tpu.dynamic_rotate %30 by %c241_i32 dim 1 : vector<8x256xf32>, i32 -> vector<8x256xf32>
    %c1_i32_14 = arith.constant 1 : i32
    %32 = tpu.dynamic_rotate %30 by %c1_i32_14 dim 1 : vector<8x256xf32>, i32 -> vector<8x256xf32>
    %33 = arith.select %26, %31, %32 : vector<8x256xi1>, vector<8x256xf32>
    %c15_i32_15 = arith.constant 15 : i32
    %34 = tpu.dynamic_rotate %30 by %c15_i32_15 dim 1 : vector<8x256xf32>, i32 -> vector<8x256xf32>
    %c255_i32 = arith.constant 255 : i32
    %35 = tpu.dynamic_rotate %30 by %c255_i32 dim 1 : vector<8x256xf32>, i32 -> vector<8x256xf32>
    %36 = arith.select %28, %34, %35 : vector<8x256xi1>, vector<8x256xf32>
    %c16_i32_16 = arith.constant 16 : i32
    %37 = tpu.dynamic_rotate %33 by %c16_i32_16 dim 1 : vector<8x256xf32>, i32 -> vector<8x256xf32>
    %c0_17 = arith.constant 0 : index
    %c0_18 = arith.constant 0 : index
    %38 = vector.load %arg7[%c0_17, %c0_18] : memref<72x256xf32, #tpu.memory_space<vmem>>, vector<8x256xf32>
    tpu.vector_store %arg7[%c0_17, %c0_18], %37 {strides = array<i32>} : memref<72x256xf32, #tpu.memory_space<vmem>>, vector<8x256xf32>,
    %c16_i32_19 = arith.constant 16 : i32
    %39 = tpu.dynamic_rotate %30 by %c16_i32_19 dim 1 : vector<8x256xf32>, i32 -> vector<8x256xf32>
    %c8 = arith.constant 8 : index
    %c0_20 = arith.constant 0 : index
    %40 = vector.load %arg7[%c8, %c0_20] : memref<72x256xf32, #tpu.memory_space<vmem>>, vector<8x256xf32>
    tpu.vector_store %arg7[%c8, %c0_20], %39 {strides = array<i32>} : memref<72x256xf32, #tpu.memory_space<vmem>>, vector<8x256xf32>,
    %c16_i32_21 = arith.constant 16 : i32
    %41 = tpu.dynamic_rotate %36 by %c16_i32_21 dim 1 : vector<8x256xf32>, i32 -> vector<8x256xf32>
    %c16 = arith.constant 16 : index
    %c0_22 = arith.constant 0 : index
    %42 = vector.load %arg7[%c16, %c0_22] : memref<72x256xf32, #tpu.memory_space<vmem>>, vector<8x256xf32>
    tpu.vector_store %arg7[%c16, %c0_22], %41 {strides = array<i32>} : memref<72x256xf32, #tpu.memory_space<vmem>>, vector<8x256xf32>,
    %c24 = arith.constant 24 : index
    %c0_23 = arith.constant 0 : index
    %43 = vector.load %arg7[%c24, %c0_23] : memref<72x256xf32, #tpu.memory_space<vmem>>, vector<8x256xf32>
    tpu.vector_store %arg7[%c24, %c0_23], %33 {strides = array<i32>} : memref<72x256xf32, #tpu.memory_space<vmem>>, vector<8x256xf32>,
    %c32 = arith.constant 32 : index
    %c0_24 = arith.constant 0 : index
    %44 = vector.load %arg7[%c32, %c0_24] : memref<72x256xf32, #tpu.memory_space<vmem>>, vector<8x256xf32>
    tpu.vector_store %arg7[%c32, %c0_24], %30 {strides = array<i32>} : memref<72x256xf32, #tpu.memory_space<vmem>>, vector<8x256xf32>,
    %c40 = arith.constant 40 : index
    %c0_25 = arith.constant 0 : index
    %45 = vector.load %arg7[%c40, %c0_25] : memref<72x256xf32, #tpu.memory_space<vmem>>, vector<8x256xf32>
    tpu.vector_store %arg7[%c40, %c0_25], %36 {strides = array<i32>} : memref<72x256xf32, #tpu.memory_space<vmem>>, vector<8x256xf32>,
    %c240_i32 = arith.constant 240 : i32
    %46 = tpu.dynamic_rotate %33 by %c240_i32 dim 1 : vector<8x256xf32>, i32 -> vector<8x256xf32>
    %c48 = arith.constant 48 : index
    %c0_26 = arith.constant 0 : index
    %47 = vector.load %arg7[%c48, %c0_26] : memref<72x256xf32, #tpu.memory_space<vmem>>, vector<8x256xf32>
    tpu.vector_store %arg7[%c48, %c0_26], %46 {strides = array<i32>} : memref<72x256xf32, #tpu.memory_space<vmem>>, vector<8x256xf32>,
    %c240_i32_27 = arith.constant 240 : i32
    %48 = tpu.dynamic_rotate %30 by %c240_i32_27 dim 1 : vector<8x256xf32>, i32 -> vector<8x256xf32>
    %c56 = arith.constant 56 : index
    %c0_28 = arith.constant 0 : index
    %49 = vector.load %arg7[%c56, %c0_28] : memref<72x256xf32, #tpu.memory_space<vmem>>, vector<8x256xf32>
    tpu.vector_store %arg7[%c56, %c0_28], %48 {strides = array<i32>} : memref<72x256xf32, #tpu.memory_space<vmem>>, vector<8x256xf32>,
    %c240_i32_29 = arith.constant 240 : i32
    %50 = tpu.dynamic_rotate %36 by %c240_i32_29 dim 1 : vector<8x256xf32>, i32 -> vector<8x256xf32>
    %c64 = arith.constant 64 : index
    %c0_30 = arith.constant 0 : index
    %51 = vector.load %arg7[%c64, %c0_30] : memref<72x256xf32, #tpu.memory_space<vmem>>, vector<8x256xf32>
    tpu.vector_store %arg7[%c64, %c0_30], %50 {strides = array<i32>} : memref<72x256xf32, #tpu.memory_space<vmem>>, vector<8x256xf32>,
    %c0_31 = arith.constant 0 : index
    %c0_32 = arith.constant 0 : index
    %52 = vector.load %arg7[%c0_31, %c0_32] : memref<72x256xf32, #tpu.memory_space<vmem>>, vector<72x256xf32>
    %cst = arith.constant dense<0.000000e+00> : vector<8x256xf32>
    %53 = tpu.matmul %0, %52, %cst {dimension_numbers = #tpu.dot_dimension_numbers<[1], [0], [0], [1], [0, 0, 1, 1], [], []>} : vector<8x72xf32>, vector<72x256xf32>, vector<8x256xf32> -> vector<8x256xf32>
    %54 = arith.addf %53, %4 : vector<8x256xf32>
    %cst_33 = arith.constant 0.000000e+00 : f32
    %55 = vector.broadcast %cst_33 : f32 to vector<8x256xf32>
    %56 = arith.maximumf %54, %55 : vector<8x256xf32>
    %c241_i32_34 = arith.constant 241 : i32
    %57 = tpu.dynamic_rotate %56 by %c241_i32_34 dim 1 : vector<8x256xf32>, i32 -> vector<8x256xf32>
    %c1_i32_35 = arith.constant 1 : i32
    %58 = tpu.dynamic_rotate %56 by %c1_i32_35 dim 1 : vector<8x256xf32>, i32 -> vector<8x256xf32>
    %59 = arith.select %26, %57, %58 : vector<8x256xi1>, vector<8x256xf32>
    %c15_i32_36 = arith.constant 15 : i32
    %60 = tpu.dynamic_rotate %56 by %c15_i32_36 dim 1 : vector<8x256xf32>, i32 -> vector<8x256xf32>
    %c255_i32_37 = arith.constant 255 : i32
    %61 = tpu.dynamic_rotate %56 by %c255_i32_37 dim 1 : vector<8x256xf32>, i32 -> vector<8x256xf32>
    %62 = arith.select %28, %60, %61 : vector<8x256xi1>, vector<8x256xf32>
    %c16_i32_38 = arith.constant 16 : i32
    %63 = tpu.dynamic_rotate %59 by %c16_i32_38 dim 1 : vector<8x256xf32>, i32 -> vector<8x256xf32>
    %c0_39 = arith.constant 0 : index
    %c0_40 = arith.constant 0 : index
    %64 = vector.load %arg7[%c0_39, %c0_40] : memref<72x256xf32, #tpu.memory_space<vmem>>, vector<8x256xf32>
    tpu.vector_store %arg7[%c0_39, %c0_40], %63 {strides = array<i32>} : memref<72x256xf32, #tpu.memory_space<vmem>>, vector<8x256xf32>,
    %c16_i32_41 = arith.constant 16 : i32
    %65 = tpu.dynamic_rotate %56 by %c16_i32_41 dim 1 : vector<8x256xf32>, i32 -> vector<8x256xf32>
    %c8_42 = arith.constant 8 : index
    %c0_43 = arith.constant 0 : index
    %66 = vector.load %arg7[%c8_42, %c0_43] : memref<72x256xf32, #tpu.memory_space<vmem>>, vector<8x256xf32>
    tpu.vector_store %arg7[%c8_42, %c0_43], %65 {strides = array<i32>} : memref<72x256xf32, #tpu.memory_space<vmem>>, vector<8x256xf32>,
    %c16_i32_44 = arith.constant 16 : i32
    %67 = tpu.dynamic_rotate %62 by %c16_i32_44 dim 1 : vector<8x256xf32>, i32 -> vector<8x256xf32>
    %c16_45 = arith.constant 16 : index
    %c0_46 = arith.constant 0 : index
    %68 = vector.load %arg7[%c16_45, %c0_46] : memref<72x256xf32, #tpu.memory_space<vmem>>, vector<8x256xf32>
    tpu.vector_store %arg7[%c16_45, %c0_46], %67 {strides = array<i32>} : memref<72x256xf32, #tpu.memory_space<vmem>>, vector<8x256xf32>,
    %c24_47 = arith.constant 24 : index
    %c0_48 = arith.constant 0 : index
    %69 = vector.load %arg7[%c24_47, %c0_48] : memref<72x256xf32, #tpu.memory_space<vmem>>, vector<8x256xf32>
    tpu.vector_store %arg7[%c24_47, %c0_48], %59 {strides = array<i32>} : memref<72x256xf32, #tpu.memory_space<vmem>>, vector<8x256xf32>,
    %c32_49 = arith.constant 32 : index
    %c0_50 = arith.constant 0 : index
    %70 = vector.load %arg7[%c32_49, %c0_50] : memref<72x256xf32, #tpu.memory_space<vmem>>, vector<8x256xf32>
    tpu.vector_store %arg7[%c32_49, %c0_50], %56 {strides = array<i32>} : memref<72x256xf32, #tpu.memory_space<vmem>>, vector<8x256xf32>,
    %c40_51 = arith.constant 40 : index
    %c0_52 = arith.constant 0 : index
    %71 = vector.load %arg7[%c40_51, %c0_52] : memref<72x256xf32, #tpu.memory_space<vmem>>, vector<8x256xf32>
    tpu.vector_store %arg7[%c40_51, %c0_52], %62 {strides = array<i32>} : memref<72x256xf32, #tpu.memory_space<vmem>>, vector<8x256xf32>,
    %c240_i32_53 = arith.constant 240 : i32
    %72 = tpu.dynamic_rotate %59 by %c240_i32_53 dim 1 : vector<8x256xf32>, i32 -> vector<8x256xf32>
    %c48_54 = arith.constant 48 : index
    %c0_55 = arith.constant 0 : index
    %73 = vector.load %arg7[%c48_54, %c0_55] : memref<72x256xf32, #tpu.memory_space<vmem>>, vector<8x256xf32>
    tpu.vector_store %arg7[%c48_54, %c0_55], %72 {strides = array<i32>} : memref<72x256xf32, #tpu.memory_space<vmem>>, vector<8x256xf32>,
    %c240_i32_56 = arith.constant 240 : i32
    %74 = tpu.dynamic_rotate %56 by %c240_i32_56 dim 1 : vector<8x256xf32>, i32 -> vector<8x256xf32>
    %c56_57 = arith.constant 56 : index
    %c0_58 = arith.constant 0 : index
    %75 = vector.load %arg7[%c56_57, %c0_58] : memref<72x256xf32, #tpu.memory_space<vmem>>, vector<8x256xf32>
    tpu.vector_store %arg7[%c56_57, %c0_58], %74 {strides = array<i32>} : memref<72x256xf32, #tpu.memory_space<vmem>>, vector<8x256xf32>,
    %c240_i32_59 = arith.constant 240 : i32
    %76 = tpu.dynamic_rotate %62 by %c240_i32_59 dim 1 : vector<8x256xf32>, i32 -> vector<8x256xf32>
    %c64_60 = arith.constant 64 : index
    %c0_61 = arith.constant 0 : index
    %77 = vector.load %arg7[%c64_60, %c0_61] : memref<72x256xf32, #tpu.memory_space<vmem>>, vector<8x256xf32>
    tpu.vector_store %arg7[%c64_60, %c0_61], %76 {strides = array<i32>} : memref<72x256xf32, #tpu.memory_space<vmem>>, vector<8x256xf32>,
    %c0_62 = arith.constant 0 : index
    %c0_63 = arith.constant 0 : index
    %78 = vector.load %arg7[%c0_62, %c0_63] : memref<72x256xf32, #tpu.memory_space<vmem>>, vector<72x256xf32>
    %cst_64 = arith.constant dense<0.000000e+00> : vector<8x256xf32>
    %79 = tpu.matmul %1, %78, %cst_64 {dimension_numbers = #tpu.dot_dimension_numbers<[1], [0], [0], [1], [0, 0, 1, 1], [], []>} : vector<8x72xf32>, vector<72x256xf32>, vector<8x256xf32> -> vector<8x256xf32>
    %80 = arith.addf %79, %7 : vector<8x256xf32>
    %81 = arith.addf %80, %30 : vector<8x256xf32>
    %cst_65 = arith.constant 0.000000e+00 : f32
    %82 = vector.broadcast %cst_65 : f32 to vector<8x256xf32>
    %83 = arith.maximumf %81, %82 : vector<8x256xf32>
    %c241_i32_66 = arith.constant 241 : i32
    %84 = tpu.dynamic_rotate %83 by %c241_i32_66 dim 1 : vector<8x256xf32>, i32 -> vector<8x256xf32>
    %c1_i32_67 = arith.constant 1 : i32
    %85 = tpu.dynamic_rotate %83 by %c1_i32_67 dim 1 : vector<8x256xf32>, i32 -> vector<8x256xf32>
    %86 = arith.select %26, %84, %85 : vector<8x256xi1>, vector<8x256xf32>
    %c15_i32_68 = arith.constant 15 : i32
    %87 = tpu.dynamic_rotate %83 by %c15_i32_68 dim 1 : vector<8x256xf32>, i32 -> vector<8x256xf32>
    %c255_i32_69 = arith.constant 255 : i32
    %88 = tpu.dynamic_rotate %83 by %c255_i32_69 dim 1 : vector<8x256xf32>, i32 -> vector<8x256xf32>
    %89 = arith.select %28, %87, %88 : vector<8x256xi1>, vector<8x256xf32>
    %c16_i32_70 = arith.constant 16 : i32
    %90 = tpu.dynamic_rotate %86 by %c16_i32_70 dim 1 : vector<8x256xf32>, i32 -> vector<8x256xf32>
    %c0_71 = arith.constant 0 : index
    %c0_72 = arith.constant 0 : index
    %91 = vector.load %arg7[%c0_71, %c0_72] : memref<72x256xf32, #tpu.memory_space<vmem>>, vector<8x256xf32>
    tpu.vector_store %arg7[%c0_71, %c0_72], %90 {strides = array<i32>} : memref<72x256xf32, #tpu.memory_space<vmem>>, vector<8x256xf32>,
    %c16_i32_73 = arith.constant 16 : i32
    %92 = tpu.dynamic_rotate %83 by %c16_i32_73 dim 1 : vector<8x256xf32>, i32 -> vector<8x256xf32>
    %c8_74 = arith.constant 8 : index
    %c0_75 = arith.constant 0 : index
    %93 = vector.load %arg7[%c8_74, %c0_75] : memref<72x256xf32, #tpu.memory_space<vmem>>, vector<8x256xf32>
    tpu.vector_store %arg7[%c8_74, %c0_75], %92 {strides = array<i32>} : memref<72x256xf32, #tpu.memory_space<vmem>>, vector<8x256xf32>,
    %c16_i32_76 = arith.constant 16 : i32
    %94 = tpu.dynamic_rotate %89 by %c16_i32_76 dim 1 : vector<8x256xf32>, i32 -> vector<8x256xf32>
    %c16_77 = arith.constant 16 : index
    %c0_78 = arith.constant 0 : index
    %95 = vector.load %arg7[%c16_77, %c0_78] : memref<72x256xf32, #tpu.memory_space<vmem>>, vector<8x256xf32>
    tpu.vector_store %arg7[%c16_77, %c0_78], %94 {strides = array<i32>} : memref<72x256xf32, #tpu.memory_space<vmem>>, vector<8x256xf32>,
    %c24_79 = arith.constant 24 : index
    %c0_80 = arith.constant 0 : index
    %96 = vector.load %arg7[%c24_79, %c0_80] : memref<72x256xf32, #tpu.memory_space<vmem>>, vector<8x256xf32>
    tpu.vector_store %arg7[%c24_79, %c0_80], %86 {strides = array<i32>} : memref<72x256xf32, #tpu.memory_space<vmem>>, vector<8x256xf32>,
    %c32_81 = arith.constant 32 : index
    %c0_82 = arith.constant 0 : index
    %97 = vector.load %arg7[%c32_81, %c0_82] : memref<72x256xf32, #tpu.memory_space<vmem>>, vector<8x256xf32>
    tpu.vector_store %arg7[%c32_81, %c0_82], %83 {strides = array<i32>} : memref<72x256xf32, #tpu.memory_space<vmem>>, vector<8x256xf32>,
    %c40_83 = arith.constant 40 : index
    %c0_84 = arith.constant 0 : index
    %98 = vector.load %arg7[%c40_83, %c0_84] : memref<72x256xf32, #tpu.memory_space<vmem>>, vector<8x256xf32>
    tpu.vector_store %arg7[%c40_83, %c0_84], %89 {strides = array<i32>} : memref<72x256xf32, #tpu.memory_space<vmem>>, vector<8x256xf32>,
    %c240_i32_85 = arith.constant 240 : i32
    %99 = tpu.dynamic_rotate %86 by %c240_i32_85 dim 1 : vector<8x256xf32>, i32 -> vector<8x256xf32>
    %c48_86 = arith.constant 48 : index
    %c0_87 = arith.constant 0 : index
    %100 = vector.load %arg7[%c48_86, %c0_87] : memref<72x256xf32, #tpu.memory_space<vmem>>, vector<8x256xf32>
    tpu.vector_store %arg7[%c48_86, %c0_87], %99 {strides = array<i32>} : memref<72x256xf32, #tpu.memory_space<vmem>>, vector<8x256xf32>,
    %c240_i32_88 = arith.constant 240 : i32
    %101 = tpu.dynamic_rotate %83 by %c240_i32_88 dim 1 : vector<8x256xf32>, i32 -> vector<8x256xf32>
    %c56_89 = arith.constant 56 : index
    %c0_90 = arith.constant 0 : index
    %102 = vector.load %arg7[%c56_89, %c0_90] : memref<72x256xf32, #tpu.memory_space<vmem>>, vector<8x256xf32>
    tpu.vector_store %arg7[%c56_89, %c0_90], %101 {strides = array<i32>} : memref<72x256xf32, #tpu.memory_space<vmem>>, vector<8x256xf32>,
    %c240_i32_91 = arith.constant 240 : i32
    %103 = tpu.dynamic_rotate %89 by %c240_i32_91 dim 1 : vector<8x256xf32>, i32 -> vector<8x256xf32>
    %c64_92 = arith.constant 64 : index
    %c0_93 = arith.constant 0 : index
    %104 = vector.load %arg7[%c64_92, %c0_93] : memref<72x256xf32, #tpu.memory_space<vmem>>, vector<8x256xf32>
    tpu.vector_store %arg7[%c64_92, %c0_93], %103 {strides = array<i32>} : memref<72x256xf32, #tpu.memory_space<vmem>>, vector<8x256xf32>,
    %c0_94 = arith.constant 0 : index
    %c0_95 = arith.constant 0 : index
    %105 = vector.load %arg7[%c0_94, %c0_95] : memref<72x256xf32, #tpu.memory_space<vmem>>, vector<72x256xf32>
    %cst_96 = arith.constant dense<0.000000e+00> : vector<8x256xf32>
    %106 = tpu.matmul %0, %105, %cst_96 {dimension_numbers = #tpu.dot_dimension_numbers<[1], [0], [0], [1], [0, 0, 1, 1], [], []>} : vector<8x72xf32>, vector<72x256xf32>, vector<8x256xf32> -> vector<8x256xf32>
    %107 = arith.addf %106, %4 : vector<8x256xf32>
    %cst_97 = arith.constant 0.000000e+00 : f32
    %108 = vector.broadcast %cst_97 : f32 to vector<8x256xf32>
    %109 = arith.maximumf %107, %108 : vector<8x256xf32>
    %c241_i32_98 = arith.constant 241 : i32
    %110 = tpu.dynamic_rotate %109 by %c241_i32_98 dim 1 : vector<8x256xf32>, i32 -> vector<8x256xf32>
    %c1_i32_99 = arith.constant 1 : i32
    %111 = tpu.dynamic_rotate %109 by %c1_i32_99 dim 1 : vector<8x256xf32>, i32 -> vector<8x256xf32>
    %112 = arith.select %26, %110, %111 : vector<8x256xi1>, vector<8x256xf32>
    %c15_i32_100 = arith.constant 15 : i32
    %113 = tpu.dynamic_rotate %109 by %c15_i32_100 dim 1 : vector<8x256xf32>, i32 -> vector<8x256xf32>
    %c255_i32_101 = arith.constant 255 : i32
    %114 = tpu.dynamic_rotate %109 by %c255_i32_101 dim 1 : vector<8x256xf32>, i32 -> vector<8x256xf32>
    %115 = arith.select %28, %113, %114 : vector<8x256xi1>, vector<8x256xf32>
    %c16_i32_102 = arith.constant 16 : i32
    %116 = tpu.dynamic_rotate %112 by %c16_i32_102 dim 1 : vector<8x256xf32>, i32 -> vector<8x256xf32>
    %c0_103 = arith.constant 0 : index
    %c0_104 = arith.constant 0 : index
    %117 = vector.load %arg7[%c0_103, %c0_104] : memref<72x256xf32, #tpu.memory_space<vmem>>, vector<8x256xf32>
    tpu.vector_store %arg7[%c0_103, %c0_104], %116 {strides = array<i32>} : memref<72x256xf32, #tpu.memory_space<vmem>>, vector<8x256xf32>,
    %c16_i32_105 = arith.constant 16 : i32
    %118 = tpu.dynamic_rotate %109 by %c16_i32_105 dim 1 : vector<8x256xf32>, i32 -> vector<8x256xf32>
    %c8_106 = arith.constant 8 : index
    %c0_107 = arith.constant 0 : index
    %119 = vector.load %arg7[%c8_106, %c0_107] : memref<72x256xf32, #tpu.memory_space<vmem>>, vector<8x256xf32>
    tpu.vector_store %arg7[%c8_106, %c0_107], %118 {strides = array<i32>} : memref<72x256xf32, #tpu.memory_space<vmem>>, vector<8x256xf32>,
    %c16_i32_108 = arith.constant 16 : i32
    %120 = tpu.dynamic_rotate %115 by %c16_i32_108 dim 1 : vector<8x256xf32>, i32 -> vector<8x256xf32>
    %c16_109 = arith.constant 16 : index
    %c0_110 = arith.constant 0 : index
    %121 = vector.load %arg7[%c16_109, %c0_110] : memref<72x256xf32, #tpu.memory_space<vmem>>, vector<8x256xf32>
    tpu.vector_store %arg7[%c16_109, %c0_110], %120 {strides = array<i32>} : memref<72x256xf32, #tpu.memory_space<vmem>>, vector<8x256xf32>,
    %c24_111 = arith.constant 24 : index
    %c0_112 = arith.constant 0 : index
    %122 = vector.load %arg7[%c24_111, %c0_112] : memref<72x256xf32, #tpu.memory_space<vmem>>, vector<8x256xf32>
    tpu.vector_store %arg7[%c24_111, %c0_112], %112 {strides = array<i32>} : memref<72x256xf32, #tpu.memory_space<vmem>>, vector<8x256xf32>,
    %c32_113 = arith.constant 32 : index
    %c0_114 = arith.constant 0 : index
    %123 = vector.load %arg7[%c32_113, %c0_114] : memref<72x256xf32, #tpu.memory_space<vmem>>, vector<8x256xf32>
    tpu.vector_store %arg7[%c32_113, %c0_114], %109 {strides = array<i32>} : memref<72x256xf32, #tpu.memory_space<vmem>>, vector<8x256xf32>,
    %c40_115 = arith.constant 40 : index
    %c0_116 = arith.constant 0 : index
    %124 = vector.load %arg7[%c40_115, %c0_116] : memref<72x256xf32, #tpu.memory_space<vmem>>, vector<8x256xf32>
    tpu.vector_store %arg7[%c40_115, %c0_116], %115 {strides = array<i32>} : memref<72x256xf32, #tpu.memory_space<vmem>>, vector<8x256xf32>,
    %c240_i32_117 = arith.constant 240 : i32
    %125 = tpu.dynamic_rotate %112 by %c240_i32_117 dim 1 : vector<8x256xf32>, i32 -> vector<8x256xf32>
    %c48_118 = arith.constant 48 : index
    %c0_119 = arith.constant 0 : index
    %126 = vector.load %arg7[%c48_118, %c0_119] : memref<72x256xf32, #tpu.memory_space<vmem>>, vector<8x256xf32>
    tpu.vector_store %arg7[%c48_118, %c0_119], %125 {strides = array<i32>} : memref<72x256xf32, #tpu.memory_space<vmem>>, vector<8x256xf32>,
    %c240_i32_120 = arith.constant 240 : i32
    %127 = tpu.dynamic_rotate %109 by %c240_i32_120 dim 1 : vector<8x256xf32>, i32 -> vector<8x256xf32>
    %c56_121 = arith.constant 56 : index
    %c0_122 = arith.constant 0 : index
    %128 = vector.load %arg7[%c56_121, %c0_122] : memref<72x256xf32, #tpu.memory_space<vmem>>, vector<8x256xf32>
    tpu.vector_store %arg7[%c56_121, %c0_122], %127 {strides = array<i32>} : memref<72x256xf32, #tpu.memory_space<vmem>>, vector<8x256xf32>,
    %c240_i32_123 = arith.constant 240 : i32
    %129 = tpu.dynamic_rotate %115 by %c240_i32_123 dim 1 : vector<8x256xf32>, i32 -> vector<8x256xf32>
    %c64_124 = arith.constant 64 : index
    %c0_125 = arith.constant 0 : index
    %130 = vector.load %arg7[%c64_124, %c0_125] : memref<72x256xf32, #tpu.memory_space<vmem>>, vector<8x256xf32>
    tpu.vector_store %arg7[%c64_124, %c0_125], %129 {strides = array<i32>} : memref<72x256xf32, #tpu.memory_space<vmem>>, vector<8x256xf32>,
    %c0_126 = arith.constant 0 : index
    %c0_127 = arith.constant 0 : index
    %131 = vector.load %arg7[%c0_126, %c0_127] : memref<72x256xf32, #tpu.memory_space<vmem>>, vector<72x256xf32>
    %cst_128 = arith.constant dense<0.000000e+00> : vector<8x256xf32>
    %132 = tpu.matmul %1, %131, %cst_128 {dimension_numbers = #tpu.dot_dimension_numbers<[1], [0], [0], [1], [0, 0, 1, 1], [], []>} : vector<8x72xf32>, vector<72x256xf32>, vector<8x256xf32> -> vector<8x256xf32>
    %133 = arith.addf %132, %7 : vector<8x256xf32>
    %134 = arith.addf %133, %83 : vector<8x256xf32>
    %cst_129 = arith.constant 0.000000e+00 : f32
    %135 = vector.broadcast %cst_129 : f32 to vector<8x256xf32>
    %136 = arith.maximumf %134, %135 : vector<8x256xf32>
    %c0_130 = arith.constant 0 : index
    %c0_131 = arith.constant 0 : index
    %c0_132 = arith.constant 0 : index
    %137 = vector.load %arg6[%c0_130, %c0_131, %c0_132] : memref<2x8x256xf32, #tpu.memory_space<vmem>>, vector<1x8x256xf32>
    %138 = vector.shape_cast %137 : vector<1x8x256xf32> to vector<8x256xf32>
    %139 = vector.shape_cast %136 : vector<8x256xf32> to vector<1x8x256xf32>
    tpu.vector_store %arg6[%c0_130, %c0_131, %c0_132], %139 {strides = array<i32>} : memref<2x8x256xf32, #tpu.memory_space<vmem>>, vector<1x8x256xf32>,
    %c1 = arith.constant 1 : index
    %c0_133 = arith.constant 0 : index
    %c0_134 = arith.constant 0 : index
    %140 = vector.load %arg1[%c1, %c0_133, %c0_134] : memref<2x8x256xf32, #tpu.memory_space<vmem>>, vector<1x8x256xf32>
    %141 = vector.shape_cast %140 : vector<1x8x256xf32> to vector<8x256xf32>
    %c241_i32_135 = arith.constant 241 : i32
    %142 = tpu.dynamic_rotate %141 by %c241_i32_135 dim 1 : vector<8x256xf32>, i32 -> vector<8x256xf32>
    %c1_i32_136 = arith.constant 1 : i32
    %143 = tpu.dynamic_rotate %141 by %c1_i32_136 dim 1 : vector<8x256xf32>, i32 -> vector<8x256xf32>
    %144 = arith.select %26, %142, %143 : vector<8x256xi1>, vector<8x256xf32>
    %c15_i32_137 = arith.constant 15 : i32
    %145 = tpu.dynamic_rotate %141 by %c15_i32_137 dim 1 : vector<8x256xf32>, i32 -> vector<8x256xf32>
    %c255_i32_138 = arith.constant 255 : i32
    %146 = tpu.dynamic_rotate %141 by %c255_i32_138 dim 1 : vector<8x256xf32>, i32 -> vector<8x256xf32>
    %147 = arith.select %28, %145, %146 : vector<8x256xi1>, vector<8x256xf32>
    %c16_i32_139 = arith.constant 16 : i32
    %148 = tpu.dynamic_rotate %144 by %c16_i32_139 dim 1 : vector<8x256xf32>, i32 -> vector<8x256xf32>
    %c0_140 = arith.constant 0 : index
    %c0_141 = arith.constant 0 : index
    %149 = vector.load %arg7[%c0_140, %c0_141] : memref<72x256xf32, #tpu.memory_space<vmem>>, vector<8x256xf32>
    tpu.vector_store %arg7[%c0_140, %c0_141], %148 {strides = array<i32>} : memref<72x256xf32, #tpu.memory_space<vmem>>, vector<8x256xf32>,
    %c16_i32_142 = arith.constant 16 : i32
    %150 = tpu.dynamic_rotate %141 by %c16_i32_142 dim 1 : vector<8x256xf32>, i32 -> vector<8x256xf32>
    %c8_143 = arith.constant 8 : index
    %c0_144 = arith.constant 0 : index
    %151 = vector.load %arg7[%c8_143, %c0_144] : memref<72x256xf32, #tpu.memory_space<vmem>>, vector<8x256xf32>
    tpu.vector_store %arg7[%c8_143, %c0_144], %150 {strides = array<i32>} : memref<72x256xf32, #tpu.memory_space<vmem>>, vector<8x256xf32>,
    %c16_i32_145 = arith.constant 16 : i32
    %152 = tpu.dynamic_rotate %147 by %c16_i32_145 dim 1 : vector<8x256xf32>, i32 -> vector<8x256xf32>
    %c16_146 = arith.constant 16 : index
    %c0_147 = arith.constant 0 : index
    %153 = vector.load %arg7[%c16_146, %c0_147] : memref<72x256xf32, #tpu.memory_space<vmem>>, vector<8x256xf32>
    tpu.vector_store %arg7[%c16_146, %c0_147], %152 {strides = array<i32>} : memref<72x256xf32, #tpu.memory_space<vmem>>, vector<8x256xf32>,
    %c24_148 = arith.constant 24 : index
    %c0_149 = arith.constant 0 : index
    %154 = vector.load %arg7[%c24_148, %c0_149] : memref<72x256xf32, #tpu.memory_space<vmem>>, vector<8x256xf32>
    tpu.vector_store %arg7[%c24_148, %c0_149], %144 {strides = array<i32>} : memref<72x256xf32, #tpu.memory_space<vmem>>, vector<8x256xf32>,
    %c32_150 = arith.constant 32 : index
    %c0_151 = arith.constant 0 : index
    %155 = vector.load %arg7[%c32_150, %c0_151] : memref<72x256xf32, #tpu.memory_space<vmem>>, vector<8x256xf32>
    tpu.vector_store %arg7[%c32_150, %c0_151], %141 {strides = array<i32>} : memref<72x256xf32, #tpu.memory_space<vmem>>, vector<8x256xf32>,
    %c40_152 = arith.constant 40 : index
    %c0_153 = arith.constant 0 : index
    %156 = vector.load %arg7[%c40_152, %c0_153] : memref<72x256xf32, #tpu.memory_space<vmem>>, vector<8x256xf32>
    tpu.vector_store %arg7[%c40_152, %c0_153], %147 {strides = array<i32>} : memref<72x256xf32, #tpu.memory_space<vmem>>, vector<8x256xf32>,
    %c240_i32_154 = arith.constant 240 : i32
    %157 = tpu.dynamic_rotate %144 by %c240_i32_154 dim 1 : vector<8x256xf32>, i32 -> vector<8x256xf32>
    %c48_155 = arith.constant 48 : index
    %c0_156 = arith.constant 0 : index
    %158 = vector.load %arg7[%c48_155, %c0_156] : memref<72x256xf32, #tpu.memory_space<vmem>>, vector<8x256xf32>
    tpu.vector_store %arg7[%c48_155, %c0_156], %157 {strides = array<i32>} : memref<72x256xf32, #tpu.memory_space<vmem>>, vector<8x256xf32>,
    %c240_i32_157 = arith.constant 240 : i32
    %159 = tpu.dynamic_rotate %141 by %c240_i32_157 dim 1 : vector<8x256xf32>, i32 -> vector<8x256xf32>
    %c56_158 = arith.constant 56 : index
    %c0_159 = arith.constant 0 : index
    %160 = vector.load %arg7[%c56_158, %c0_159] : memref<72x256xf32, #tpu.memory_space<vmem>>, vector<8x256xf32>
    tpu.vector_store %arg7[%c56_158, %c0_159], %159 {strides = array<i32>} : memref<72x256xf32, #tpu.memory_space<vmem>>, vector<8x256xf32>,
    %c240_i32_160 = arith.constant 240 : i32
    %161 = tpu.dynamic_rotate %147 by %c240_i32_160 dim 1 : vector<8x256xf32>, i32 -> vector<8x256xf32>
    %c64_161 = arith.constant 64 : index
    %c0_162 = arith.constant 0 : index
    %162 = vector.load %arg7[%c64_161, %c0_162] : memref<72x256xf32, #tpu.memory_space<vmem>>, vector<8x256xf32>
    tpu.vector_store %arg7[%c64_161, %c0_162], %161 {strides = array<i32>} : memref<72x256xf32, #tpu.memory_space<vmem>>, vector<8x256xf32>,
    %c0_163 = arith.constant 0 : index
    %c0_164 = arith.constant 0 : index
    %163 = vector.load %arg7[%c0_163, %c0_164] : memref<72x256xf32, #tpu.memory_space<vmem>>, vector<72x256xf32>
    %cst_165 = arith.constant dense<0.000000e+00> : vector<8x256xf32>
    %164 = tpu.matmul %0, %163, %cst_165 {dimension_numbers = #tpu.dot_dimension_numbers<[1], [0], [0], [1], [0, 0, 1, 1], [], []>} : vector<8x72xf32>, vector<72x256xf32>, vector<8x256xf32> -> vector<8x256xf32>
    %165 = arith.addf %164, %4 : vector<8x256xf32>
    %cst_166 = arith.constant 0.000000e+00 : f32
    %166 = vector.broadcast %cst_166 : f32 to vector<8x256xf32>
    %167 = arith.maximumf %165, %166 : vector<8x256xf32>
    %c241_i32_167 = arith.constant 241 : i32
    %168 = tpu.dynamic_rotate %167 by %c241_i32_167 dim 1 : vector<8x256xf32>, i32 -> vector<8x256xf32>
    %c1_i32_168 = arith.constant 1 : i32
    %169 = tpu.dynamic_rotate %167 by %c1_i32_168 dim 1 : vector<8x256xf32>, i32 -> vector<8x256xf32>
    %170 = arith.select %26, %168, %169 : vector<8x256xi1>, vector<8x256xf32>
    %c15_i32_169 = arith.constant 15 : i32
    %171 = tpu.dynamic_rotate %167 by %c15_i32_169 dim 1 : vector<8x256xf32>, i32 -> vector<8x256xf32>
    %c255_i32_170 = arith.constant 255 : i32
    %172 = tpu.dynamic_rotate %167 by %c255_i32_170 dim 1 : vector<8x256xf32>, i32 -> vector<8x256xf32>
    %173 = arith.select %28, %171, %172 : vector<8x256xi1>, vector<8x256xf32>
    %c16_i32_171 = arith.constant 16 : i32
    %174 = tpu.dynamic_rotate %170 by %c16_i32_171 dim 1 : vector<8x256xf32>, i32 -> vector<8x256xf32>
    %c0_172 = arith.constant 0 : index
    %c0_173 = arith.constant 0 : index
    %175 = vector.load %arg7[%c0_172, %c0_173] : memref<72x256xf32, #tpu.memory_space<vmem>>, vector<8x256xf32>
    tpu.vector_store %arg7[%c0_172, %c0_173], %174 {strides = array<i32>} : memref<72x256xf32, #tpu.memory_space<vmem>>, vector<8x256xf32>,
    %c16_i32_174 = arith.constant 16 : i32
    %176 = tpu.dynamic_rotate %167 by %c16_i32_174 dim 1 : vector<8x256xf32>, i32 -> vector<8x256xf32>
    %c8_175 = arith.constant 8 : index
    %c0_176 = arith.constant 0 : index
    %177 = vector.load %arg7[%c8_175, %c0_176] : memref<72x256xf32, #tpu.memory_space<vmem>>, vector<8x256xf32>
    tpu.vector_store %arg7[%c8_175, %c0_176], %176 {strides = array<i32>} : memref<72x256xf32, #tpu.memory_space<vmem>>, vector<8x256xf32>,
    %c16_i32_177 = arith.constant 16 : i32
    %178 = tpu.dynamic_rotate %173 by %c16_i32_177 dim 1 : vector<8x256xf32>, i32 -> vector<8x256xf32>
    %c16_178 = arith.constant 16 : index
    %c0_179 = arith.constant 0 : index
    %179 = vector.load %arg7[%c16_178, %c0_179] : memref<72x256xf32, #tpu.memory_space<vmem>>, vector<8x256xf32>
    tpu.vector_store %arg7[%c16_178, %c0_179], %178 {strides = array<i32>} : memref<72x256xf32, #tpu.memory_space<vmem>>, vector<8x256xf32>,
    %c24_180 = arith.constant 24 : index
    %c0_181 = arith.constant 0 : index
    %180 = vector.load %arg7[%c24_180, %c0_181] : memref<72x256xf32, #tpu.memory_space<vmem>>, vector<8x256xf32>
    tpu.vector_store %arg7[%c24_180, %c0_181], %170 {strides = array<i32>} : memref<72x256xf32, #tpu.memory_space<vmem>>, vector<8x256xf32>,
    %c32_182 = arith.constant 32 : index
    %c0_183 = arith.constant 0 : index
    %181 = vector.load %arg7[%c32_182, %c0_183] : memref<72x256xf32, #tpu.memory_space<vmem>>, vector<8x256xf32>
    tpu.vector_store %arg7[%c32_182, %c0_183], %167 {strides = array<i32>} : memref<72x256xf32, #tpu.memory_space<vmem>>, vector<8x256xf32>,
    %c40_184 = arith.constant 40 : index
    %c0_185 = arith.constant 0 : index
    %182 = vector.load %arg7[%c40_184, %c0_185] : memref<72x256xf32, #tpu.memory_space<vmem>>, vector<8x256xf32>
    tpu.vector_store %arg7[%c40_184, %c0_185], %173 {strides = array<i32>} : memref<72x256xf32, #tpu.memory_space<vmem>>, vector<8x256xf32>,
    %c240_i32_186 = arith.constant 240 : i32
    %183 = tpu.dynamic_rotate %170 by %c240_i32_186 dim 1 : vector<8x256xf32>, i32 -> vector<8x256xf32>
    %c48_187 = arith.constant 48 : index
    %c0_188 = arith.constant 0 : index
    %184 = vector.load %arg7[%c48_187, %c0_188] : memref<72x256xf32, #tpu.memory_space<vmem>>, vector<8x256xf32>
    tpu.vector_store %arg7[%c48_187, %c0_188], %183 {strides = array<i32>} : memref<72x256xf32, #tpu.memory_space<vmem>>, vector<8x256xf32>,
    %c240_i32_189 = arith.constant 240 : i32
    %185 = tpu.dynamic_rotate %167 by %c240_i32_189 dim 1 : vector<8x256xf32>, i32 -> vector<8x256xf32>
    %c56_190 = arith.constant 56 : index
    %c0_191 = arith.constant 0 : index
    %186 = vector.load %arg7[%c56_190, %c0_191] : memref<72x256xf32, #tpu.memory_space<vmem>>, vector<8x256xf32>
    tpu.vector_store %arg7[%c56_190, %c0_191], %185 {strides = array<i32>} : memref<72x256xf32, #tpu.memory_space<vmem>>, vector<8x256xf32>,
    %c240_i32_192 = arith.constant 240 : i32
    %187 = tpu.dynamic_rotate %173 by %c240_i32_192 dim 1 : vector<8x256xf32>, i32 -> vector<8x256xf32>
    %c64_193 = arith.constant 64 : index
    %c0_194 = arith.constant 0 : index
    %188 = vector.load %arg7[%c64_193, %c0_194] : memref<72x256xf32, #tpu.memory_space<vmem>>, vector<8x256xf32>
    tpu.vector_store %arg7[%c64_193, %c0_194], %187 {strides = array<i32>} : memref<72x256xf32, #tpu.memory_space<vmem>>, vector<8x256xf32>,
    %c0_195 = arith.constant 0 : index
    %c0_196 = arith.constant 0 : index
    %189 = vector.load %arg7[%c0_195, %c0_196] : memref<72x256xf32, #tpu.memory_space<vmem>>, vector<72x256xf32>
    %cst_197 = arith.constant dense<0.000000e+00> : vector<8x256xf32>
    %190 = tpu.matmul %1, %189, %cst_197 {dimension_numbers = #tpu.dot_dimension_numbers<[1], [0], [0], [1], [0, 0, 1, 1], [], []>} : vector<8x72xf32>, vector<72x256xf32>, vector<8x256xf32> -> vector<8x256xf32>
    %191 = arith.addf %190, %7 : vector<8x256xf32>
    %192 = arith.addf %191, %141 : vector<8x256xf32>
    %cst_198 = arith.constant 0.000000e+00 : f32
    %193 = vector.broadcast %cst_198 : f32 to vector<8x256xf32>
    %194 = arith.maximumf %192, %193 : vector<8x256xf32>
    %c241_i32_199 = arith.constant 241 : i32
    %195 = tpu.dynamic_rotate %194 by %c241_i32_199 dim 1 : vector<8x256xf32>, i32 -> vector<8x256xf32>
    %c1_i32_200 = arith.constant 1 : i32
    %196 = tpu.dynamic_rotate %194 by %c1_i32_200 dim 1 : vector<8x256xf32>, i32 -> vector<8x256xf32>
    %197 = arith.select %26, %195, %196 : vector<8x256xi1>, vector<8x256xf32>
    %c15_i32_201 = arith.constant 15 : i32
    %198 = tpu.dynamic_rotate %194 by %c15_i32_201 dim 1 : vector<8x256xf32>, i32 -> vector<8x256xf32>
    %c255_i32_202 = arith.constant 255 : i32
    %199 = tpu.dynamic_rotate %194 by %c255_i32_202 dim 1 : vector<8x256xf32>, i32 -> vector<8x256xf32>
    %200 = arith.select %28, %198, %199 : vector<8x256xi1>, vector<8x256xf32>
    %c16_i32_203 = arith.constant 16 : i32
    %201 = tpu.dynamic_rotate %197 by %c16_i32_203 dim 1 : vector<8x256xf32>, i32 -> vector<8x256xf32>
    %c0_204 = arith.constant 0 : index
    %c0_205 = arith.constant 0 : index
    %202 = vector.load %arg7[%c0_204, %c0_205] : memref<72x256xf32, #tpu.memory_space<vmem>>, vector<8x256xf32>
    tpu.vector_store %arg7[%c0_204, %c0_205], %201 {strides = array<i32>} : memref<72x256xf32, #tpu.memory_space<vmem>>, vector<8x256xf32>,
    %c16_i32_206 = arith.constant 16 : i32
    %203 = tpu.dynamic_rotate %194 by %c16_i32_206 dim 1 : vector<8x256xf32>, i32 -> vector<8x256xf32>
    %c8_207 = arith.constant 8 : index
    %c0_208 = arith.constant 0 : index
    %204 = vector.load %arg7[%c8_207, %c0_208] : memref<72x256xf32, #tpu.memory_space<vmem>>, vector<8x256xf32>
    tpu.vector_store %arg7[%c8_207, %c0_208], %203 {strides = array<i32>} : memref<72x256xf32, #tpu.memory_space<vmem>>, vector<8x256xf32>,
    %c16_i32_209 = arith.constant 16 : i32
    %205 = tpu.dynamic_rotate %200 by %c16_i32_209 dim 1 : vector<8x256xf32>, i32 -> vector<8x256xf32>
    %c16_210 = arith.constant 16 : index
    %c0_211 = arith.constant 0 : index
    %206 = vector.load %arg7[%c16_210, %c0_211] : memref<72x256xf32, #tpu.memory_space<vmem>>, vector<8x256xf32>
    tpu.vector_store %arg7[%c16_210, %c0_211], %205 {strides = array<i32>} : memref<72x256xf32, #tpu.memory_space<vmem>>, vector<8x256xf32>,
    %c24_212 = arith.constant 24 : index
    %c0_213 = arith.constant 0 : index
    %207 = vector.load %arg7[%c24_212, %c0_213] : memref<72x256xf32, #tpu.memory_space<vmem>>, vector<8x256xf32>
    tpu.vector_store %arg7[%c24_212, %c0_213], %197 {strides = array<i32>} : memref<72x256xf32, #tpu.memory_space<vmem>>, vector<8x256xf32>,
    %c32_214 = arith.constant 32 : index
    %c0_215 = arith.constant 0 : index
    %208 = vector.load %arg7[%c32_214, %c0_215] : memref<72x256xf32, #tpu.memory_space<vmem>>, vector<8x256xf32>
    tpu.vector_store %arg7[%c32_214, %c0_215], %194 {strides = array<i32>} : memref<72x256xf32, #tpu.memory_space<vmem>>, vector<8x256xf32>,
    %c40_216 = arith.constant 40 : index
    %c0_217 = arith.constant 0 : index
    %209 = vector.load %arg7[%c40_216, %c0_217] : memref<72x256xf32, #tpu.memory_space<vmem>>, vector<8x256xf32>
    tpu.vector_store %arg7[%c40_216, %c0_217], %200 {strides = array<i32>} : memref<72x256xf32, #tpu.memory_space<vmem>>, vector<8x256xf32>,
    %c240_i32_218 = arith.constant 240 : i32
    %210 = tpu.dynamic_rotate %197 by %c240_i32_218 dim 1 : vector<8x256xf32>, i32 -> vector<8x256xf32>
    %c48_219 = arith.constant 48 : index
    %c0_220 = arith.constant 0 : index
    %211 = vector.load %arg7[%c48_219, %c0_220] : memref<72x256xf32, #tpu.memory_space<vmem>>, vector<8x256xf32>
    tpu.vector_store %arg7[%c48_219, %c0_220], %210 {strides = array<i32>} : memref<72x256xf32, #tpu.memory_space<vmem>>, vector<8x256xf32>,
    %c240_i32_221 = arith.constant 240 : i32
    %212 = tpu.dynamic_rotate %194 by %c240_i32_221 dim 1 : vector<8x256xf32>, i32 -> vector<8x256xf32>
    %c56_222 = arith.constant 56 : index
    %c0_223 = arith.constant 0 : index
    %213 = vector.load %arg7[%c56_222, %c0_223] : memref<72x256xf32, #tpu.memory_space<vmem>>, vector<8x256xf32>
    tpu.vector_store %arg7[%c56_222, %c0_223], %212 {strides = array<i32>} : memref<72x256xf32, #tpu.memory_space<vmem>>, vector<8x256xf32>,
    %c240_i32_224 = arith.constant 240 : i32
    %214 = tpu.dynamic_rotate %200 by %c240_i32_224 dim 1 : vector<8x256xf32>, i32 -> vector<8x256xf32>
    %c64_225 = arith.constant 64 : index
    %c0_226 = arith.constant 0 : index
    %215 = vector.load %arg7[%c64_225, %c0_226] : memref<72x256xf32, #tpu.memory_space<vmem>>, vector<8x256xf32>
    tpu.vector_store %arg7[%c64_225, %c0_226], %214 {strides = array<i32>} : memref<72x256xf32, #tpu.memory_space<vmem>>, vector<8x256xf32>,
    %c0_227 = arith.constant 0 : index
    %c0_228 = arith.constant 0 : index
    %216 = vector.load %arg7[%c0_227, %c0_228] : memref<72x256xf32, #tpu.memory_space<vmem>>, vector<72x256xf32>
    %cst_229 = arith.constant dense<0.000000e+00> : vector<8x256xf32>
    %217 = tpu.matmul %0, %216, %cst_229 {dimension_numbers = #tpu.dot_dimension_numbers<[1], [0], [0], [1], [0, 0, 1, 1], [], []>} : vector<8x72xf32>, vector<72x256xf32>, vector<8x256xf32> -> vector<8x256xf32>
    %218 = arith.addf %217, %4 : vector<8x256xf32>
    %cst_230 = arith.constant 0.000000e+00 : f32
    %219 = vector.broadcast %cst_230 : f32 to vector<8x256xf32>
    %220 = arith.maximumf %218, %219 : vector<8x256xf32>
    %c241_i32_231 = arith.constant 241 : i32
    %221 = tpu.dynamic_rotate %220 by %c241_i32_231 dim 1 : vector<8x256xf32>, i32 -> vector<8x256xf32>
    %c1_i32_232 = arith.constant 1 : i32
    %222 = tpu.dynamic_rotate %220 by %c1_i32_232 dim 1 : vector<8x256xf32>, i32 -> vector<8x256xf32>
    %223 = arith.select %26, %221, %222 : vector<8x256xi1>, vector<8x256xf32>
    %c15_i32_233 = arith.constant 15 : i32
    %224 = tpu.dynamic_rotate %220 by %c15_i32_233 dim 1 : vector<8x256xf32>, i32 -> vector<8x256xf32>
    %c255_i32_234 = arith.constant 255 : i32
    %225 = tpu.dynamic_rotate %220 by %c255_i32_234 dim 1 : vector<8x256xf32>, i32 -> vector<8x256xf32>
    %226 = arith.select %28, %224, %225 : vector<8x256xi1>, vector<8x256xf32>
    %c16_i32_235 = arith.constant 16 : i32
    %227 = tpu.dynamic_rotate %223 by %c16_i32_235 dim 1 : vector<8x256xf32>, i32 -> vector<8x256xf32>
    %c0_236 = arith.constant 0 : index
    %c0_237 = arith.constant 0 : index
    %228 = vector.load %arg7[%c0_236, %c0_237] : memref<72x256xf32, #tpu.memory_space<vmem>>, vector<8x256xf32>
    tpu.vector_store %arg7[%c0_236, %c0_237], %227 {strides = array<i32>} : memref<72x256xf32, #tpu.memory_space<vmem>>, vector<8x256xf32>,
    %c16_i32_238 = arith.constant 16 : i32
    %229 = tpu.dynamic_rotate %220 by %c16_i32_238 dim 1 : vector<8x256xf32>, i32 -> vector<8x256xf32>
    %c8_239 = arith.constant 8 : index
    %c0_240 = arith.constant 0 : index
    %230 = vector.load %arg7[%c8_239, %c0_240] : memref<72x256xf32, #tpu.memory_space<vmem>>, vector<8x256xf32>
    tpu.vector_store %arg7[%c8_239, %c0_240], %229 {strides = array<i32>} : memref<72x256xf32, #tpu.memory_space<vmem>>, vector<8x256xf32>,
    %c16_i32_241 = arith.constant 16 : i32
    %231 = tpu.dynamic_rotate %226 by %c16_i32_241 dim 1 : vector<8x256xf32>, i32 -> vector<8x256xf32>
    %c16_242 = arith.constant 16 : index
    %c0_243 = arith.constant 0 : index
    %232 = vector.load %arg7[%c16_242, %c0_243] : memref<72x256xf32, #tpu.memory_space<vmem>>, vector<8x256xf32>
    tpu.vector_store %arg7[%c16_242, %c0_243], %231 {strides = array<i32>} : memref<72x256xf32, #tpu.memory_space<vmem>>, vector<8x256xf32>,
    %c24_244 = arith.constant 24 : index
    %c0_245 = arith.constant 0 : index
    %233 = vector.load %arg7[%c24_244, %c0_245] : memref<72x256xf32, #tpu.memory_space<vmem>>, vector<8x256xf32>
    tpu.vector_store %arg7[%c24_244, %c0_245], %223 {strides = array<i32>} : memref<72x256xf32, #tpu.memory_space<vmem>>, vector<8x256xf32>,
    %c32_246 = arith.constant 32 : index
    %c0_247 = arith.constant 0 : index
    %234 = vector.load %arg7[%c32_246, %c0_247] : memref<72x256xf32, #tpu.memory_space<vmem>>, vector<8x256xf32>
    tpu.vector_store %arg7[%c32_246, %c0_247], %220 {strides = array<i32>} : memref<72x256xf32, #tpu.memory_space<vmem>>, vector<8x256xf32>,
    %c40_248 = arith.constant 40 : index
    %c0_249 = arith.constant 0 : index
    %235 = vector.load %arg7[%c40_248, %c0_249] : memref<72x256xf32, #tpu.memory_space<vmem>>, vector<8x256xf32>
    tpu.vector_store %arg7[%c40_248, %c0_249], %226 {strides = array<i32>} : memref<72x256xf32, #tpu.memory_space<vmem>>, vector<8x256xf32>,
    %c240_i32_250 = arith.constant 240 : i32
    %236 = tpu.dynamic_rotate %223 by %c240_i32_250 dim 1 : vector<8x256xf32>, i32 -> vector<8x256xf32>
    %c48_251 = arith.constant 48 : index
    %c0_252 = arith.constant 0 : index
    %237 = vector.load %arg7[%c48_251, %c0_252] : memref<72x256xf32, #tpu.memory_space<vmem>>, vector<8x256xf32>
    tpu.vector_store %arg7[%c48_251, %c0_252], %236 {strides = array<i32>} : memref<72x256xf32, #tpu.memory_space<vmem>>, vector<8x256xf32>,
    %c240_i32_253 = arith.constant 240 : i32
    %238 = tpu.dynamic_rotate %220 by %c240_i32_253 dim 1 : vector<8x256xf32>, i32 -> vector<8x256xf32>
    %c56_254 = arith.constant 56 : index
    %c0_255 = arith.constant 0 : index
    %239 = vector.load %arg7[%c56_254, %c0_255] : memref<72x256xf32, #tpu.memory_space<vmem>>, vector<8x256xf32>
    tpu.vector_store %arg7[%c56_254, %c0_255], %238 {strides = array<i32>} : memref<72x256xf32, #tpu.memory_space<vmem>>, vector<8x256xf32>,
    %c240_i32_256 = arith.constant 240 : i32
    %240 = tpu.dynamic_rotate %226 by %c240_i32_256 dim 1 : vector<8x256xf32>, i32 -> vector<8x256xf32>
    %c64_257 = arith.constant 64 : index
    %c0_258 = arith.constant 0 : index
    %241 = vector.load %arg7[%c64_257, %c0_258] : memref<72x256xf32, #tpu.memory_space<vmem>>, vector<8x256xf32>
    tpu.vector_store %arg7[%c64_257, %c0_258], %240 {strides = array<i32>} : memref<72x256xf32, #tpu.memory_space<vmem>>, vector<8x256xf32>,
    %c0_259 = arith.constant 0 : index
    %c0_260 = arith.constant 0 : index
    %242 = vector.load %arg7[%c0_259, %c0_260] : memref<72x256xf32, #tpu.memory_space<vmem>>, vector<72x256xf32>
    %cst_261 = arith.constant dense<0.000000e+00> : vector<8x256xf32>
    %243 = tpu.matmul %1, %242, %cst_261 {dimension_numbers = #tpu.dot_dimension_numbers<[1], [0], [0], [1], [0, 0, 1, 1], [], []>} : vector<8x72xf32>, vector<72x256xf32>, vector<8x256xf32> -> vector<8x256xf32>
    %244 = arith.addf %243, %7 : vector<8x256xf32>
    %245 = arith.addf %244, %194 : vector<8x256xf32>
    %cst_262 = arith.constant 0.000000e+00 : f32
    %246 = vector.broadcast %cst_262 : f32 to vector<8x256xf32>
    %247 = arith.maximumf %245, %246 : vector<8x256xf32>
    %c1_263 = arith.constant 1 : index
    %c0_264 = arith.constant 0 : index
    %c0_265 = arith.constant 0 : index
    %248 = vector.load %arg6[%c1_263, %c0_264, %c0_265] : memref<2x8x256xf32, #tpu.memory_space<vmem>>, vector<1x8x256xf32>
    %249 = vector.shape_cast %248 : vector<1x8x256xf32> to vector<8x256xf32>
    %250 = vector.shape_cast %247 : vector<8x256xf32> to vector<1x8x256xf32>
    tpu.vector_store %arg6[%c1_263, %c0_264, %c0_265], %250 {strides = array<i32>} : memref<2x8x256xf32, #tpu.memory_space<vmem>>, vector<1x8x256xf32>,
    return
  }
  func.func @transform_0(%arg0: i32) -> (i32, i32, i32) {
    %c0_i32 = arith.constant 0 : i32
    %c0_i32_0 = arith.constant 0 : i32
    %c0_i32_1 = arith.constant 0 : i32
    return %arg0, %c0_i32, %c0_i32_0 : i32, i32, i32
  }
  func.func @transform_1(%arg0: i32) -> (i32, i32) {
    %c0_i32 = arith.constant 0 : i32
    %c0_i32_0 = arith.constant 0 : i32
    %c0_i32_1 = arith.constant 0 : i32
    return %c0_i32, %c0_i32_0 : i32, i32
  }
  func.func @transform_2(%arg0: i32) -> (i32, i32) {
    %c0_i32 = arith.constant 0 : i32
    %c0_i32_0 = arith.constant 0 : i32
    %c0_i32_1 = arith.constant 0 : i32
    return %c0_i32, %c0_i32_0 : i32, i32
  }
  func.func @transform_3(%arg0: i32) -> (i32, i32) {
    %c0_i32 = arith.constant 0 : i32
    %c0_i32_0 = arith.constant 0 : i32
    %c0_i32_1 = arith.constant 0 : i32
    return %c0_i32, %c0_i32_0 : i32, i32
  }
  func.func @transform_4(%arg0: i32) -> (i32, i32) {
    %c0_i32 = arith.constant 0 : i32
    %c0_i32_0 = arith.constant 0 : i32
    %c0_i32_1 = arith.constant 0 : i32
    return %c0_i32, %c0_i32_0 : i32, i32
  }
  func.func @transform_5(%arg0: i32) -> (i32, i32, i32) {
    %c0_i32 = arith.constant 0 : i32
    %c0_i32_0 = arith.constant 0 : i32
    %c0_i32_1 = arith.constant 0 : i32
    return %arg0, %c0_i32, %c0_i32_0 : i32, i32, i32
  }
}

</mosaic_0001>

<llo_original>
// kernel: tpu_custom_call.1
$region0: #{tpu_custom_call.1}
  #allocation0 [shape = 'u32[]', space=smem, size = 0x4, offset = 0x4, fixed_abs, tag = 'smem constant byte address 0x4 - core index']
  #allocation1 [shape = 'u32[144,128]{1,0:T(1,128)}', space=vmem, size = 0x12000, scoped, tag = 'internal scratch']
  #allocation2 [shape = 'f32[72,256]{1,0:T(8,128)}', space=vmem, size = 0x12000, scoped, tag = 'scratch operand']
  %s0 = inlined_call_operand.hbm [shape: f32[2,8,256], index: 0, kind: input, shape index: {}]
  %s1 = inlined_call_operand.vmem [shape: f32[8,72], index: 1, kind: input, shape index: {}]
  %s2 = inlined_call_operand.vmem [shape: f32[8,1], index: 2, kind: input, shape index: {}]
  %s3 = inlined_call_operand.vmem [shape: f32[8,72], index: 3, kind: input, shape index: {}]
  %s4 = inlined_call_operand.vmem [shape: f32[8,1], index: 4, kind: input, shape index: {}]
  %s5 = inlined_call_operand.hbm [shape: f32[2,8,256], index: 5, kind: output, shape index: {}]
  %s6 = sld [smem:[#allocation0]]
  $region34: #{tpu_custom_call.1} parent=0
    _
  %s8 = ssub.s32 1, %s6
  %s9 = scalar_select 0, %s8, %s6
  $region1: #{tpu_custom_call.1} parent=0
    #allocation3 [shape = 'u8[16384]{0}', space=vmem, size = 0x4000, scoped, tag = 'input window, operand 0, single buffered']
    #allocation4 [shape = 's32[1]{0}', space=sflag, size = 0x4, scoped, tag = 'scoped memory for tpu_custom_call.1']
    #allocation5 [shape = 's32[1]{0}', space=sflag, size = 0x4, scoped, tag = 'scoped memory for tpu_custom_call.1']
    #allocation6 [shape = 'u8[16384]{0}', space=vmem, size = 0x4000, scoped, tag = 'output window, operand 0, single buffered']
    %10 = vsyncpa [#allocation4], 0
    %11 = vsyncpa [#allocation5], 0
    // Predicated region
    $region2: #{tpu_custom_call.1} parent=1 // pred_check
      _
    $region3: #{tpu_custom_call.1} parent=1 // pred_check_branch
      %13 = sbr.rel (0) target = $region5
    $region4: #{tpu_custom_call.1} parent=1 // pred_region
      %s15 = ssub.s32 512, 512
      %16 = vsyncadd [#allocation4], %s15
      %s17 = sshll.u32 [#allocation3], 4
      %s18 = int_to_ptr.vmem [resolvable:$true] %s17
      %23 = dma.hbm_to_vmem [thread:$0]  %s0, 512, %s18, [#allocation4], 256, 256, 16
    $region5: #{tpu_custom_call.1} parent=1 // pred_fallthru
      _
    // Predicated region
    $region6: #{tpu_custom_call.1} parent=1 // pred_check
      _
    $region7: #{tpu_custom_call.1} parent=1 // pred_check_branch
      %25 = sbr.rel (0) target = $region9
    $region8: #{tpu_custom_call.1} parent=1 // pred_region
      _
    $region9: #{tpu_custom_call.1} parent=1 // pred_fallthru
      _
    // Predicated region
    $region10: #{tpu_custom_call.1} parent=1 // pred_check
      _
    $region11: #{tpu_custom_call.1} parent=1 // pred_check_branch
      %27 = sbr.rel (0) target = $region13
    $region12: #{tpu_custom_call.1} parent=1 // pred_region
      _
    $region13: #{tpu_custom_call.1} parent=1 // pred_fallthru
      _
    // Predicated region
    $region14: #{tpu_custom_call.1} parent=1 // pred_check
      _
    $region15: #{tpu_custom_call.1} parent=1 // pred_check_branch
      %29 = sbr.rel (0) target = $region17
    $region16: #{tpu_custom_call.1} parent=1 // pred_region
      _
    $region17: #{tpu_custom_call.1} parent=1 // pred_fallthru
      _
    // Predicated region
    $region18: #{tpu_custom_call.1} parent=1 // pred_check
      _
    $region19: #{tpu_custom_call.1} parent=1 // pred_check_branch
      %31 = sbr.rel (0) target = $region21
    $region20: #{tpu_custom_call.1} parent=1 // pred_region
      _
    $region21: #{tpu_custom_call.1} parent=1 // pred_fallthru
      _
    // Predicated region
    $region22: #{tpu_custom_call.1} parent=1 // pred_check
      _
    $region23: #{tpu_custom_call.1} parent=1 // pred_check_branch
      %33 = sbr.rel (0) target = $region25
    $region24: #{tpu_custom_call.1} parent=1 // pred_region
      %34 = dma.done [#allocation4], 512
    $region25: #{tpu_custom_call.1} parent=1 // pred_fallthru
      _
    %v35 = vld [vmem:[%s1] sm:$0xff]
    %v36 = vld [vmem:[%s3] sm:$0xff]
    %v37 = vld [vmem:[%s2] sm:$0xff]
    %39 = vset.pattern.permute.xlu0 0
    %40 = vperm.xlu0 %39, %v37
    %v41 = vpop.permute.xlu0 %40
    %v43 = vld [vmem:[%s4] sm:$0xff]
    %45 = vset.pattern.permute.xlu0 0
    %46 = vperm.xlu0 %45, %v43
    %v47 = vpop.permute.xlu0 %46
    %v49 = vlaneseq
    %v50 = vand.u32 %v49, 127
    %v51 = vadd.s32 %v50, 128
    %vm52 = vcmp.lt.s32.totalorder %v50, 0
    %v53 = vsub.s32 0, %v50
    %v54 = vsel %vm52, %v53, %v50
    %v55 = vshrl.u32 %v54, 4
    %v56 = vand.u32 %v54, 15
    %v57 = vsub.s32 0, %v56
    %v58 = vsel %vm52, %v57, %v56
    %vm59 = vcmp.lt.s32.totalorder %v51, 0
    %v60 = vsub.s32 0, %v51
    %v61 = vsel %vm59, %v60, %v51
    %v62 = vshrl.u32 %v61, 4
    %v63 = vand.u32 %v61, 15
    %v64 = vsub.s32 0, %v63
    %v65 = vsel %vm59, %v64, %v63
    %vm66 = vcmp.ne.s32.totalorder %v58, 0
    %vm67 = vcmp.ne.s32.totalorder %v65, 0
    %vm68 = vcmp.lt.s32.totalorder %v58, 0
    %vm69 = vcmp.lt.s32.totalorder %v65, 0
    %vm70 = vmand %vm68, %vm66
    %vm71 = vmand %vm69, %vm67
    %v72 = vadd.s32 %v58, 16
    %v73 = vadd.s32 %v65, 16
    %v74 = vsel %vm70, %v72, %v58
    %v75 = vsel %vm71, %v73, %v65
    %vm76 = vcmp.eq.s32.totalorder %v74, 0
    %vm77 = vcmp.eq.s32.totalorder %v75, 0
    %vm78 = vcmp.eq.s32.totalorder %v74, 15
    %vm79 = vcmp.eq.s32.totalorder %v75, 15
    %v80 = vld [vmem:[#allocation3] sm:$0xff]
    %v81 = vld [vmem:[#allocation3 + $0x8] sm:$0xff]
    %82 = vrot.lane.b32.xlu0 %v80, 113
    %v83 = vpop.permute.xlu0 %82
    %84 = vrot.lane.b32.xlu0 %v81, 113
    %v85 = vpop.permute.xlu0 %84
    %vm86 = vcmp.lt.s32.totalorder %v50, 113
    %v87 = vsel %vm86, %v83, %v85
    %v88 = vsel %vm86, %v85, %v83
    %89 = vrot.lane.b32.xlu0 %v80, 1
    %v90 = vpop.permute.xlu0 %89
    %91 = vrot.lane.b32.xlu0 %v81, 1
    %v92 = vpop.permute.xlu0 %91
    %vm93 = vcmp.lt.s32.totalorder %v50, 1
    %v94 = vsel %vm93, %v90, %v92
    %v95 = vsel %vm93, %v92, %v90
    %v96 = vsel %vm76, %v87, %v95
    %v97 = vsel %vm77, %v88, %v94
    %98 = vrot.lane.b32.xlu0 %v80, 15
    %v99 = vpop.permute.xlu0 %98
    %100 = vrot.lane.b32.xlu0 %v81, 15
    %v101 = vpop.permute.xlu0 %100
    %vm102 = vcmp.lt.s32.totalorder %v50, 15
    %v103 = vsel %vm102, %v99, %v101
    %v104 = vsel %vm102, %v101, %v99
    %105 = vrot.lane.b32.xlu0 %v80, 127
    %v106 = vpop.permute.xlu0 %105
    %107 = vrot.lane.b32.xlu0 %v81, 127
    %v108 = vpop.permute.xlu0 %107
    %vm109 = vcmp.lt.s32.totalorder %v50, 127
    %v110 = vsel %vm109, %v106, %v108
    %v111 = vsel %vm109, %v108, %v106
    %v112 = vsel %vm78, %v104, %v110
    %v113 = vsel %vm79, %v103, %v111
    %114 = vrot.lane.b32.xlu0 %v96, 16
    %v115 = vpop.permute.xlu0 %114
    %116 = vrot.lane.b32.xlu0 %v97, 16
    %v117 = vpop.permute.xlu0 %116
    %vm118 = vcmp.lt.s32.totalorder %v50, 16
    %v119 = vsel %vm118, %v115, %v117
    %v120 = vsel %vm118, %v117, %v115
    %121 = vst [vmem:[#allocation2] sm:$0xff] %v120
    %122 = vst [vmem:[#allocation2 + $0x8] sm:$0xff] %v119
    %123 = vrot.lane.b32.xlu0 %v80, 16
    %v124 = vpop.permute.xlu0 %123
    %125 = vrot.lane.b32.xlu0 %v81, 16
    %v126 = vpop.permute.xlu0 %125
    %v127 = vsel %vm118, %v124, %v126
    %v128 = vsel %vm118, %v126, %v124
    %129 = vst [vmem:[#allocation2 + $0x10] sm:$0xff] %v128
    %130 = vst [vmem:[#allocation2 + $0x18] sm:$0xff] %v127
    %131 = vrot.lane.b32.xlu0 %v112, 16
    %v132 = vpop.permute.xlu0 %131
    %133 = vrot.lane.b32.xlu0 %v113, 16
    %v134 = vpop.permute.xlu0 %133
    %v135 = vsel %vm118, %v132, %v134
    %v136 = vsel %vm118, %v134, %v132
    %137 = vst [vmem:[#allocation2 + $0x20] sm:$0xff] %v136
    %138 = vst [vmem:[#allocation2 + $0x28] sm:$0xff] %v135
    %139 = vst [vmem:[#allocation2 + $0x30] sm:$0xff] %v96
    %140 = vst [vmem:[#allocation2 + $0x38] sm:$0xff] %v97
    %141 = vst [vmem:[#allocation2 + $0x40] sm:$0xff] %v80
    %142 = vst [vmem:[#allocation2 + $0x48] sm:$0xff] %v81
    %143 = vst [vmem:[#allocation2 + $0x50] sm:$0xff] %v112
    %144 = vst [vmem:[#allocation2 + $0x58] sm:$0xff] %v113
    %145 = vrot.lane.b32.xlu0 %v96, 112
    %v146 = vpop.permute.xlu0 %145
    %147 = vrot.lane.b32.xlu0 %v97, 112
    %v148 = vpop.permute.xlu0 %147
    %vm149 = vcmp.lt.s32.totalorder %v50, 112
    %v150 = vsel %vm149, %v146, %v148
    %v151 = vsel %vm149, %v148, %v146
    %152 = vst [vmem:[#allocation2 + $0x60] sm:$0xff] %v150
    %153 = vst [vmem:[#allocation2 + $0x68] sm:$0xff] %v151
    %154 = vrot.lane.b32.xlu0 %v80, 112
    %v155 = vpop.permute.xlu0 %154
    %156 = vrot.lane.b32.xlu0 %v81, 112
    %v157 = vpop.permute.xlu0 %156
    %v158 = vsel %vm149, %v155, %v157
    %v159 = vsel %vm149, %v157, %v155
    %160 = vst [vmem:[#allocation2 + $0x70] sm:$0xff] %v158
    %161 = vst [vmem:[#allocation2 + $0x78] sm:$0xff] %v159
    %162 = vrot.lane.b32.xlu0 %v112, 112
    %v163 = vpop.permute.xlu0 %162
    %164 = vrot.lane.b32.xlu0 %v113, 112
    %v165 = vpop.permute.xlu0 %164
    %v166 = vsel %vm149, %v163, %v165
    %v167 = vsel %vm149, %v165, %v163
    %168 = vst [vmem:[#allocation2 + $0x80] sm:$0xff] %v166
    %169 = vst [vmem:[#allocation2 + $0x88] sm:$0xff] %v167
    %v170 = vld [vmem:[#allocation2] sm:$0xff]
    %v171 = vld [vmem:[#allocation2 + $0x8] sm:$0xff]
    %v172 = vld [vmem:[#allocation2 + $0x10] sm:$0xff]
    %v173 = vld [vmem:[#allocation2 + $0x18] sm:$0xff]
    %v174 = vld [vmem:[#allocation2 + $0x20] sm:$0xff]
    %v175 = vld [vmem:[#allocation2 + $0x28] sm:$0xff]
    %v176 = vld [vmem:[#allocation2 + $0x30] sm:$0xff]
    %v177 = vld [vmem:[#allocation2 + $0x38] sm:$0xff]
    %v178 = vld [vmem:[#allocation2 + $0x40] sm:$0xff]
    %v179 = vld [vmem:[#allocation2 + $0x48] sm:$0xff]
    %v180 = vld [vmem:[#allocation2 + $0x50] sm:$0xff]
    %v181 = vld [vmem:[#allocation2 + $0x58] sm:$0xff]
    %v182 = vld [vmem:[#allocation2 + $0x60] sm:$0xff]
    %v183 = vld [vmem:[#allocation2 + $0x68] sm:$0xff]
    %v184 = vld [vmem:[#allocation2 + $0x70] sm:$0xff]
    %v185 = vld [vmem:[#allocation2 + $0x78] sm:$0xff]
    %v186 = vld [vmem:[#allocation2 + $0x80] sm:$0xff]
    %v187 = vld [vmem:[#allocation2 + $0x88] sm:$0xff]
    %vm188 = vcmask 588800
    %v190 = vsel %vm188, %v35, 0
    %192 = vmatprep.subr.mxu0 %v171
    %193 = vmatpush1.msra.mxu0 %v170
    %194 = vmatprep.subr.mxu0 %v173
    %195 = vmatpush1.msra.mxu0 %v172
    %196 = vmatprep.subr.mxu0 %v175
    %197 = vmatpush1.msra.mxu0 %v174
    %198 = vmatprep.subr.mxu0 %v177
    %199 = vmatpush1.msra.mxu0 %v176
    %200 = vmatprep.subr.mxu0 %v179
    %201 = vmatpush1.msra.mxu0 %v178
    %202 = vmatprep.subr.mxu0 %v181
    %203 = vmatpush1.msra.mxu0 %v180
    %204 = vmatprep.subr.mxu0 %v183
    %205 = vmatpush1.msra.mxu0 %v182
    %206 = vmatprep.subr.mxu0 %v185
    %207 = vmatpush1.msra.mxu0 %v184
    %208 = vmatprep.subr.mxu0 %v187
    %209 = vmatpush1.msra.mxu0 %v186
    %210 = vmatprep.subr.mxu0 0.0
    %211 = vmatpush1.msra.mxu0 0.0
    %212 = vmatprep.subr.mxu0 0.0
    %213 = vmatpush1.msra.mxu0 0.0
    %214 = vmatprep.subr.mxu0 0.0
    %215 = vmatpush1.msra.mxu0 0.0
    %216 = vmatprep.subr.mxu0 0.0
    %217 = vmatpush1.msra.mxu0 0.0
    %218 = vmatprep.subr.mxu0 0.0
    %219 = vmatpush1.msra.mxu0 0.0
    %220 = vmatprep.subr.mxu0 0.0
    %221 = vmatpush1.msra.mxu0 0.0
    %222 = vmatprep.subr.mxu0 0.0
    %223 = vmatpush1.msra.mxu0 0.0
    %224 = vmatprep.subr.mxu0 0.0
    %225 = vmatpush1.msra.mxu0 0.0
    %226 = vmatprep.subr.mxu0 0.0
    %227 = vmatpush1.msra.mxu0 0.0
    %228 = vmatprep.subr.mxu0 0.0
    %229 = vmatpush1.msra.mxu0 0.0
    %230 = vmatprep.subr.mxu0 0.0
    %231 = vmatpush1.msra.mxu0 0.0
    %232 = vmatprep.subr.mxu0 0.0
    %233 = vmatpush1.msra.mxu0 0.0
    %234 = vmatprep.subr.mxu0 0.0
    %235 = vmatpush1.msra.mxu0 0.0
    %236 = vmatprep.subr.mxu0 0.0
    %237 = vmatpush1.msra.mxu0 0.0
    %238 = vmatprep.subr.mxu0 0.0
    %239 = vmatpush1.msra.mxu0 0.0
    %240 = vmatprep.subr.mxu0 0.0
    %241 = vmatpush1.msra.mxu0 0.0
    %242 = vmatprep.subr.mxu0 0.0
    %243 = vmatpush1.msra.mxu0 0.0
    %244 = vmatprep.subr.mxu0 0.0
    %245 = vmatpush1.msra.mxu0 0.0
    %246 = vmatprep.subr.mxu0 0.0
    %247 = vmatpush1.msra.mxu0 0.0
    %248 = vmatprep.subr.mxu0 0.0
    %249 = vmatpush1.msra.mxu0 0.0
    %250 = vmatprep.subr.mxu0 0.0
    %251 = vmatpush1.msra.mxu0 0.0
    %252 = vmatprep.subr.mxu0 0.0
    %253 = vmatpush1.msra.mxu0 0.0
    %254 = vmatprep.subr.mxu0 0.0
    %255 = vmatpush1.msra.mxu0 0.0
    %256 = vmatprep.mubr.f32.mxu0 0.0
    %257 = vmatmul.mubr.f32.gmra.mrb[0].mxu0 %v190
    %v258 = vpop.f32.mrb[0].mxu0
    %v259 = vadd.f32 %v41, %v258
    %v260 = vpop.f32.mrb[0].mxu0
    %v261 = vadd.f32 %v41, %v260
    %262 = vdwg.mxu0
    %v263 = vmax.f32 %v259, 0.0
    %v264 = vmax.f32 %v261, 0.0
    %265 = vrot.lane.b32.xlu0 %v263, 113
    %v266 = vpop.permute.xlu0 %265
    %267 = vrot.lane.b32.xlu0 %v264, 113
    %v268 = vpop.permute.xlu0 %267
    %v269 = vsel %vm86, %v266, %v268
    %v270 = vsel %vm86, %v268, %v266
    %271 = vrot.lane.b32.xlu0 %v263, 1
    %v272 = vpop.permute.xlu0 %271
    %273 = vrot.lane.b32.xlu0 %v264, 1
    %v274 = vpop.permute.xlu0 %273
    %v275 = vsel %vm93, %v272, %v274
    %v276 = vsel %vm93, %v274, %v272
    %v277 = vsel %vm76, %v269, %v276
    %v278 = vsel %vm77, %v270, %v275
    %279 = vrot.lane.b32.xlu0 %v263, 15
    %v280 = vpop.permute.xlu0 %279
    %281 = vrot.lane.b32.xlu0 %v264, 15
    %v282 = vpop.permute.xlu0 %281
    %v283 = vsel %vm102, %v280, %v282
    %v284 = vsel %vm102, %v282, %v280
    %285 = vrot.lane.b32.xlu0 %v263, 127
    %v286 = vpop.permute.xlu0 %285
    %287 = vrot.lane.b32.xlu0 %v264, 127
    %v288 = vpop.permute.xlu0 %287
    %v289 = vsel %vm109, %v286, %v288
    %v290 = vsel %vm109, %v288, %v286
    %v291 = vsel %vm78, %v284, %v289
    %v292 = vsel %vm79, %v283, %v290
    %293 = vrot.lane.b32.xlu0 %v277, 16
    %v294 = vpop.permute.xlu0 %293
    %295 = vrot.lane.b32.xlu0 %v278, 16
    %v296 = vpop.permute.xlu0 %295
    %v297 = vsel %vm118, %v294, %v296
    %v298 = vsel %vm118, %v296, %v294
    %299 = vst [vmem:[#allocation2] sm:$0xff] %v298
    %300 = vst [vmem:[#allocation2 + $0x8] sm:$0xff] %v297
    %301 = vrot.lane.b32.xlu0 %v263, 16
    %v302 = vpop.permute.xlu0 %301
    %303 = vrot.lane.b32.xlu0 %v264, 16
    %v304 = vpop.permute.xlu0 %303
    %v305 = vsel %vm118, %v302, %v304
    %v306 = vsel %vm118, %v304, %v302
    %307 = vst [vmem:[#allocation2 + $0x10] sm:$0xff] %v306
    %308 = vst [vmem:[#allocation2 + $0x18] sm:$0xff] %v305
    %309 = vrot.lane.b32.xlu0 %v291, 16
    %v310 = vpop.permute.xlu0 %309
    %311 = vrot.lane.b32.xlu0 %v292, 16
    %v312 = vpop.permute.xlu0 %311
    %v313 = vsel %vm118, %v310, %v312
    %v314 = vsel %vm118, %v312, %v310
    %315 = vst [vmem:[#allocation2 + $0x20] sm:$0xff] %v314
    %316 = vst [vmem:[#allocation2 + $0x28] sm:$0xff] %v313
    %317 = vst [vmem:[#allocation2 + $0x30] sm:$0xff] %v277
    %318 = vst [vmem:[#allocation2 + $0x38] sm:$0xff] %v278
    %319 = vst [vmem:[#allocation2 + $0x40] sm:$0xff] %v263
    %320 = vst [vmem:[#allocation2 + $0x48] sm:$0xff] %v264
    %321 = vst [vmem:[#allocation2 + $0x50] sm:$0xff] %v291
    %322 = vst [vmem:[#allocation2 + $0x58] sm:$0xff] %v292
    %323 = vrot.lane.b32.xlu0 %v277, 112
    %v324 = vpop.permute.xlu0 %323
    %325 = vrot.lane.b32.xlu0 %v278, 112
    %v326 = vpop.permute.xlu0 %325
    %v327 = vsel %vm149, %v324, %v326
    %v328 = vsel %vm149, %v326, %v324
    %329 = vst [vmem:[#allocation2 + $0x60] sm:$0xff] %v327
    %330 = vst [vmem:[#allocation2 + $0x68] sm:$0xff] %v328
    %331 = vrot.lane.b32.xlu0 %v263, 112
    %v332 = vpop.permute.xlu0 %331
    %333 = vrot.lane.b32.xlu0 %v264, 112
    %v334 = vpop.permute.xlu0 %333
    %v335 = vsel %vm149, %v332, %v334
    %v336 = vsel %vm149, %v334, %v332
    %337 = vst [vmem:[#allocation2 + $0x70] sm:$0xff] %v335
    %338 = vst [vmem:[#allocation2 + $0x78] sm:$0xff] %v336
    %339 = vrot.lane.b32.xlu0 %v291, 112
    %v340 = vpop.permute.xlu0 %339
    %341 = vrot.lane.b32.xlu0 %v292, 112
    %v342 = vpop.permute.xlu0 %341
    %v343 = vsel %vm149, %v340, %v342
    %v344 = vsel %vm149, %v342, %v340
    %345 = vst [vmem:[#allocation2 + $0x80] sm:$0xff] %v343
    %346 = vst [vmem:[#allocation2 + $0x88] sm:$0xff] %v344
    %v347 = vld [vmem:[#allocation2] sm:$0xff]
    %v348 = vld [vmem:[#allocation2 + $0x8] sm:$0xff]
    %v349 = vld [vmem:[#allocation2 + $0x10] sm:$0xff]
    %v350 = vld [vmem:[#allocation2 + $0x18] sm:$0xff]
    %v351 = vld [vmem:[#allocation2 + $0x20] sm:$0xff]
    %v352 = vld [vmem:[#allocation2 + $0x28] sm:$0xff]
    %v353 = vld [vmem:[#allocation2 + $0x30] sm:$0xff]
    %v354 = vld [vmem:[#allocation2 + $0x38] sm:$0xff]
    %v355 = vld [vmem:[#allocation2 + $0x40] sm:$0xff]
    %v356 = vld [vmem:[#allocation2 + $0x48] sm:$0xff]
    %v357 = vld [vmem:[#allocation2 + $0x50] sm:$0xff]
    %v358 = vld [vmem:[#allocation2 + $0x58] sm:$0xff]
    %v359 = vld [vmem:[#allocation2 + $0x60] sm:$0xff]
    %v360 = vld [vmem:[#allocation2 + $0x68] sm:$0xff]
    %v361 = vld [vmem:[#allocation2 + $0x70] sm:$0xff]
    %v362 = vld [vmem:[#allocation2 + $0x78] sm:$0xff]
    %v363 = vld [vmem:[#allocation2 + $0x80] sm:$0xff]
    %v364 = vld [vmem:[#allocation2 + $0x88] sm:$0xff]
    %v366 = vsel %vm188, %v36, 0
    %368 = vmatprep.subr.mxu0 %v348
    %369 = vmatpush1.msra.mxu0 %v347
    %370 = vmatprep.subr.mxu0 %v350
    %371 = vmatpush1.msra.mxu0 %v349
    %372 = vmatprep.subr.mxu0 %v352
    %373 = vmatpush1.msra.mxu0 %v351
    %374 = vmatprep.subr.mxu0 %v354
    %375 = vmatpush1.msra.mxu0 %v353
    %376 = vmatprep.subr.mxu0 %v356
    %377 = vmatpush1.msra.mxu0 %v355
    %378 = vmatprep.subr.mxu0 %v358
    %379 = vmatpush1.msra.mxu0 %v357
    %380 = vmatprep.subr.mxu0 %v360
    %381 = vmatpush1.msra.mxu0 %v359
    %382 = vmatprep.subr.mxu0 %v362
    %383 = vmatpush1.msra.mxu0 %v361
    %384 = vmatprep.subr.mxu0 %v364
    %385 = vmatpush1.msra.mxu0 %v363
    %386 = vmatprep.subr.mxu0 0.0
    %387 = vmatpush1.msra.mxu0 0.0
    %388 = vmatprep.subr.mxu0 0.0
    %389 = vmatpush1.msra.mxu0 0.0
    %390 = vmatprep.subr.mxu0 0.0
    %391 = vmatpush1.msra.mxu0 0.0
    %392 = vmatprep.subr.mxu0 0.0
    %393 = vmatpush1.msra.mxu0 0.0
    %394 = vmatprep.subr.mxu0 0.0
    %395 = vmatpush1.msra.mxu0 0.0
    %396 = vmatprep.subr.mxu0 0.0
    %397 = vmatpush1.msra.mxu0 0.0
    %398 = vmatprep.subr.mxu0 0.0
    %399 = vmatpush1.msra.mxu0 0.0
    %400 = vmatprep.subr.mxu0 0.0
    %401 = vmatpush1.msra.mxu0 0.0
    %402 = vmatprep.subr.mxu0 0.0
    %403 = vmatpush1.msra.mxu0 0.0
    %404 = vmatprep.subr.mxu0 0.0
    %405 = vmatpush1.msra.mxu0 0.0
    %406 = vmatprep.subr.mxu0 0.0
    %407 = vmatpush1.msra.mxu0 0.0
    %408 = vmatprep.subr.mxu0 0.0
    %409 = vmatpush1.msra.mxu0 0.0
    %410 = vmatprep.subr.mxu0 0.0
    %411 = vmatpush1.msra.mxu0 0.0
    %412 = vmatprep.subr.mxu0 0.0
    %413 = vmatpush1.msra.mxu0 0.0
    %414 = vmatprep.subr.mxu0 0.0
    %415 = vmatpush1.msra.mxu0 0.0
    %416 = vmatprep.subr.mxu0 0.0
    %417 = vmatpush1.msra.mxu0 0.0
    %418 = vmatprep.subr.mxu0 0.0
    %419 = vmatpush1.msra.mxu0 0.0
    %420 = vmatprep.subr.mxu0 0.0
    %421 = vmatpush1.msra.mxu0 0.0
    %422 = vmatprep.subr.mxu0 0.0
    %423 = vmatpush1.msra.mxu0 0.0
    %424 = vmatprep.subr.mxu0 0.0
    %425 = vmatpush1.msra.mxu0 0.0
    %426 = vmatprep.subr.mxu0 0.0
    %427 = vmatpush1.msra.mxu0 0.0
    %428 = vmatprep.subr.mxu0 0.0
    %429 = vmatpush1.msra.mxu0 0.0
    %430 = vmatprep.subr.mxu0 0.0
    %431 = vmatpush1.msra.mxu0 0.0
    %432 = vmatprep.mubr.f32.mxu0 0.0
    %433 = vmatmul.mubr.f32.gmra.mrb[0].mxu0 %v366
    %v434 = vpop.f32.mrb[0].mxu0
    %v435 = vadd.f32 %v47, %v434
    %v436 = vpop.f32.mrb[0].mxu0
    %v437 = vadd.f32 %v47, %v436
    %438 = vdwg.mxu0
    %v439 = vadd.f32 %v435, %v80
    %v440 = vadd.f32 %v437, %v81
    %v441 = vmax.f32 %v439, 0.0
    %v442 = vmax.f32 %v440, 0.0
    %443 = vrot.lane.b32.xlu0 %v441, 113
    %v444 = vpop.permute.xlu0 %443
    %445 = vrot.lane.b32.xlu0 %v442, 113
    %v446 = vpop.permute.xlu0 %445
    %v447 = vsel %vm86, %v444, %v446
    %v448 = vsel %vm86, %v446, %v444
    %449 = vrot.lane.b32.xlu0 %v441, 1
    %v450 = vpop.permute.xlu0 %449
    %451 = vrot.lane.b32.xlu0 %v442, 1
    %v452 = vpop.permute.xlu0 %451
    %v453 = vsel %vm93, %v450, %v452
    %v454 = vsel %vm93, %v452, %v450
    %v455 = vsel %vm76, %v447, %v454
    %v456 = vsel %vm77, %v448, %v453
    %457 = vrot.lane.b32.xlu0 %v441, 15
    %v458 = vpop.permute.xlu0 %457
    %459 = vrot.lane.b32.xlu0 %v442, 15
    %v460 = vpop.permute.xlu0 %459
    %v461 = vsel %vm102, %v458, %v460
    %v462 = vsel %vm102, %v460, %v458
    %463 = vrot.lane.b32.xlu0 %v441, 127
    %v464 = vpop.permute.xlu0 %463
    %465 = vrot.lane.b32.xlu0 %v442, 127
    %v466 = vpop.permute.xlu0 %465
    %v467 = vsel %vm109, %v464, %v466
    %v468 = vsel %vm109, %v466, %v464
    %v469 = vsel %vm78, %v462, %v467
    %v470 = vsel %vm79, %v461, %v468
    %471 = vrot.lane.b32.xlu0 %v455, 16
    %v472 = vpop.permute.xlu0 %471
    %473 = vrot.lane.b32.xlu0 %v456, 16
    %v474 = vpop.permute.xlu0 %473
    %v475 = vsel %vm118, %v472, %v474
    %v476 = vsel %vm118, %v474, %v472
    %477 = vst [vmem:[#allocation2] sm:$0xff] %v476
    %478 = vst [vmem:[#allocation2 + $0x8] sm:$0xff] %v475
    %479 = vrot.lane.b32.xlu0 %v441, 16
    %v480 = vpop.permute.xlu0 %479
    %481 = vrot.lane.b32.xlu0 %v442, 16
    %v482 = vpop.permute.xlu0 %481
    %v483 = vsel %vm118, %v480, %v482
    %v484 = vsel %vm118, %v482, %v480
    %485 = vst [vmem:[#allocation2 + $0x10] sm:$0xff] %v484
    %486 = vst [vmem:[#allocation2 + $0x18] sm:$0xff] %v483
    %487 = vrot.lane.b32.xlu0 %v469, 16
    %v488 = vpop.permute.xlu0 %487
    %489 = vrot.lane.b32.xlu0 %v470, 16
    %v490 = vpop.permute.xlu0 %489
    %v491 = vsel %vm118, %v488, %v490
    %v492 = vsel %vm118, %v490, %v488
    %493 = vst [vmem:[#allocation2 + $0x20] sm:$0xff] %v492
    %494 = vst [vmem:[#allocation2 + $0x28] sm:$0xff] %v491
    %495 = vst [vmem:[#allocation2 + $0x30] sm:$0xff] %v455
    %496 = vst [vmem:[#allocation2 + $0x38] sm:$0xff] %v456
    %497 = vst [vmem:[#allocation2 + $0x40] sm:$0xff] %v441
    %498 = vst [vmem:[#allocation2 + $0x48] sm:$0xff] %v442
    %499 = vst [vmem:[#allocation2 + $0x50] sm:$0xff] %v469
    %500 = vst [vmem:[#allocation2 + $0x58] sm:$0xff] %v470
    %501 = vrot.lane.b32.xlu0 %v455, 112
    %v502 = vpop.permute.xlu0 %501
    %503 = vrot.lane.b32.xlu0 %v456, 112
    %v504 = vpop.permute.xlu0 %503
    %v505 = vsel %vm149, %v502, %v504
    %v506 = vsel %vm149, %v504, %v502
    %507 = vst [vmem:[#allocation2 + $0x60] sm:$0xff] %v505
    %508 = vst [vmem:[#allocation2 + $0x68] sm:$0xff] %v506
    %509 = vrot.lane.b32.xlu0 %v441, 112
    %v510 = vpop.permute.xlu0 %509
    %511 = vrot.lane.b32.xlu0 %v442, 112
    %v512 = vpop.permute.xlu0 %511
    %v513 = vsel %vm149, %v510, %v512
    %v514 = vsel %vm149, %v512, %v510
    %515 = vst [vmem:[#allocation2 + $0x70] sm:$0xff] %v513
    %516 = vst [vmem:[#allocation2 + $0x78] sm:$0xff] %v514
    %517 = vrot.lane.b32.xlu0 %v469, 112
    %v518 = vpop.permute.xlu0 %517
    %519 = vrot.lane.b32.xlu0 %v470, 112
    %v520 = vpop.permute.xlu0 %519
    %v521 = vsel %vm149, %v518, %v520
    %v522 = vsel %vm149, %v520, %v518
    %523 = vst [vmem:[#allocation2 + $0x80] sm:$0xff] %v521
    %524 = vst [vmem:[#allocation2 + $0x88] sm:$0xff] %v522
    %v525 = vld [vmem:[#allocation2] sm:$0xff]
    %v526 = vld [vmem:[#allocation2 + $0x8] sm:$0xff]
    %v527 = vld [vmem:[#allocation2 + $0x10] sm:$0xff]
    %v528 = vld [vmem:[#allocation2 + $0x18] sm:$0xff]
    %v529 = vld [vmem:[#allocation2 + $0x20] sm:$0xff]
    %v530 = vld [vmem:[#allocation2 + $0x28] sm:$0xff]
    %v531 = vld [vmem:[#allocation2 + $0x30] sm:$0xff]
    %v532 = vld [vmem:[#allocation2 + $0x38] sm:$0xff]
    %v533 = vld [vmem:[#allocation2 + $0x40] sm:$0xff]
    %v534 = vld [vmem:[#allocation2 + $0x48] sm:$0xff]
    %v535 = vld [vmem:[#allocation2 + $0x50] sm:$0xff]
    %v536 = vld [vmem:[#allocation2 + $0x58] sm:$0xff]
    %v537 = vld [vmem:[#allocation2 + $0x60] sm:$0xff]
    %v538 = vld [vmem:[#allocation2 + $0x68] sm:$0xff]
    %v539 = vld [vmem:[#allocation2 + $0x70] sm:$0xff]
    %v540 = vld [vmem:[#allocation2 + $0x78] sm:$0xff]
    %v541 = vld [vmem:[#allocation2 + $0x80] sm:$0xff]
    %v542 = vld [vmem:[#allocation2 + $0x88] sm:$0xff]
    %543 = vmatprep.subr.mxu0 %v526
    %544 = vmatpush1.msra.mxu0 %v525
    %545 = vmatprep.subr.mxu0 %v528
    %546 = vmatpush1.msra.mxu0 %v527
    %547 = vmatprep.subr.mxu0 %v530
    %548 = vmatpush1.msra.mxu0 %v529
    %549 = vmatprep.subr.mxu0 %v532
    %550 = vmatpush1.msra.mxu0 %v531
    %551 = vmatprep.subr.mxu0 %v534
    %552 = vmatpush1.msra.mxu0 %v533
    %553 = vmatprep.subr.mxu0 %v536
    %554 = vmatpush1.msra.mxu0 %v535
    %555 = vmatprep.subr.mxu0 %v538
    %556 = vmatpush1.msra.mxu0 %v537
    %557 = vmatprep.subr.mxu0 %v540
    %558 = vmatpush1.msra.mxu0 %v539
    %559 = vmatprep.subr.mxu0 %v542
    %560 = vmatpush1.msra.mxu0 %v541
    %561 = vmatprep.subr.mxu0 0.0
    %562 = vmatpush1.msra.mxu0 0.0
    %563 = vmatprep.subr.mxu0 0.0
    %564 = vmatpush1.msra.mxu0 0.0
    %565 = vmatprep.subr.mxu0 0.0
    %566 = vmatpush1.msra.mxu0 0.0
    %567 = vmatprep.subr.mxu0 0.0
    %568 = vmatpush1.msra.mxu0 0.0
    %569 = vmatprep.subr.mxu0 0.0
    %570 = vmatpush1.msra.mxu0 0.0
    %571 = vmatprep.subr.mxu0 0.0
    %572 = vmatpush1.msra.mxu0 0.0
    %573 = vmatprep.subr.mxu0 0.0
    %574 = vmatpush1.msra.mxu0 0.0
    %575 = vmatprep.subr.mxu0 0.0
    %576 = vmatpush1.msra.mxu0 0.0
    %577 = vmatprep.subr.mxu0 0.0
    %578 = vmatpush1.msra.mxu0 0.0
    %579 = vmatprep.subr.mxu0 0.0
    %580 = vmatpush1.msra.mxu0 0.0
    %581 = vmatprep.subr.mxu0 0.0
    %582 = vmatpush1.msra.mxu0 0.0
    %583 = vmatprep.subr.mxu0 0.0
    %584 = vmatpush1.msra.mxu0 0.0
    %585 = vmatprep.subr.mxu0 0.0
    %586 = vmatpush1.msra.mxu0 0.0
    %587 = vmatprep.subr.mxu0 0.0
    %588 = vmatpush1.msra.mxu0 0.0
    %589 = vmatprep.subr.mxu0 0.0
    %590 = vmatpush1.msra.mxu0 0.0
    %591 = vmatprep.subr.mxu0 0.0
    %592 = vmatpush1.msra.mxu0 0.0
    %593 = vmatprep.subr.mxu0 0.0
    %594 = vmatpush1.msra.mxu0 0.0
    %595 = vmatprep.subr.mxu0 0.0
    %596 = vmatpush1.msra.mxu0 0.0
    %597 = vmatprep.subr.mxu0 0.0
    %598 = vmatpush1.msra.mxu0 0.0
    %599 = vmatprep.subr.mxu0 0.0
    %600 = vmatpush1.msra.mxu0 0.0
    %601 = vmatprep.subr.mxu0 0.0
    %602 = vmatpush1.msra.mxu0 0.0
    %603 = vmatprep.subr.mxu0 0.0
    %604 = vmatpush1.msra.mxu0 0.0
    %605 = vmatprep.subr.mxu0 0.0
    %606 = vmatpush1.msra.mxu0 0.0
    %607 = vmatprep.mubr.f32.mxu0 0.0
    %608 = vmatmul.mubr.f32.gmra.mrb[0].mxu0 %v190
    %v609 = vpop.f32.mrb[0].mxu0
    %v610 = vadd.f32 %v41, %v609
    %v611 = vpop.f32.mrb[0].mxu0
    %v612 = vadd.f32 %v41, %v611
    %613 = vdwg.mxu0
    %v614 = vmax.f32 %v610, 0.0
    %v615 = vmax.f32 %v612, 0.0
    %616 = vrot.lane.b32.xlu0 %v614, 113
    %v617 = vpop.permute.xlu0 %616
    %618 = vrot.lane.b32.xlu0 %v615, 113
    %v619 = vpop.permute.xlu0 %618
    %v620 = vsel %vm86, %v617, %v619
    %v621 = vsel %vm86, %v619, %v617
    %622 = vrot.lane.b32.xlu0 %v614, 1
    %v623 = vpop.permute.xlu0 %622
    %624 = vrot.lane.b32.xlu0 %v615, 1
    %v625 = vpop.permute.xlu0 %624
    %v626 = vsel %vm93, %v623, %v625
    %v627 = vsel %vm93, %v625, %v623
    %v628 = vsel %vm76, %v620, %v627
    %v629 = vsel %vm77, %v621, %v626
    %630 = vrot.lane.b32.xlu0 %v614, 15
    %v631 = vpop.permute.xlu0 %630
    %632 = vrot.lane.b32.xlu0 %v615, 15
    %v633 = vpop.permute.xlu0 %632
    %v634 = vsel %vm102, %v631, %v633
    %v635 = vsel %vm102, %v633, %v631
    %636 = vrot.lane.b32.xlu0 %v614, 127
    %v637 = vpop.permute.xlu0 %636
    %638 = vrot.lane.b32.xlu0 %v615, 127
    %v639 = vpop.permute.xlu0 %638
    %v640 = vsel %vm109, %v637, %v639
    %v641 = vsel %vm109, %v639, %v637
    %v642 = vsel %vm78, %v635, %v640
    %v643 = vsel %vm79, %v634, %v641
    %644 = vrot.lane.b32.xlu0 %v628, 16
    %v645 = vpop.permute.xlu0 %644
    %646 = vrot.lane.b32.xlu0 %v629, 16
    %v647 = vpop.permute.xlu0 %646
    %v648 = vsel %vm118, %v645, %v647
    %v649 = vsel %vm118, %v647, %v645
    %650 = vst [vmem:[#allocation2] sm:$0xff] %v649
    %651 = vst [vmem:[#allocation2 + $0x8] sm:$0xff] %v648
    %652 = vrot.lane.b32.xlu0 %v614, 16
    %v653 = vpop.permute.xlu0 %652
    %654 = vrot.lane.b32.xlu0 %v615, 16
    %v655 = vpop.permute.xlu0 %654
    %v656 = vsel %vm118, %v653, %v655
    %v657 = vsel %vm118, %v655, %v653
    %658 = vst [vmem:[#allocation2 + $0x10] sm:$0xff] %v657
    %659 = vst [vmem:[#allocation2 + $0x18] sm:$0xff] %v656
    %660 = vrot.lane.b32.xlu0 %v642, 16
    %v661 = vpop.permute.xlu0 %660
    %662 = vrot.lane.b32.xlu0 %v643, 16
    %v663 = vpop.permute.xlu0 %662
    %v664 = vsel %vm118, %v661, %v663
    %v665 = vsel %vm118, %v663, %v661
    %666 = vst [vmem:[#allocation2 + $0x20] sm:$0xff] %v665
    %667 = vst [vmem:[#allocation2 + $0x28] sm:$0xff] %v664
    %668 = vst [vmem:[#allocation2 + $0x30] sm:$0xff] %v628
    %669 = vst [vmem:[#allocation2 + $0x38] sm:$0xff] %v629
    %670 = vst [vmem:[#allocation2 + $0x40] sm:$0xff] %v614
    %671 = vst [vmem:[#allocation2 + $0x48] sm:$0xff] %v615
    %672 = vst [vmem:[#allocation2 + $0x50] sm:$0xff] %v642
    %673 = vst [vmem:[#allocation2 + $0x58] sm:$0xff] %v643
    %674 = vrot.lane.b32.xlu0 %v628, 112
    %v675 = vpop.permute.xlu0 %674
    %676 = vrot.lane.b32.xlu0 %v629, 112
    %v677 = vpop.permute.xlu0 %676
    %v678 = vsel %vm149, %v675, %v677
    %v679 = vsel %vm149, %v677, %v675
    %680 = vst [vmem:[#allocation2 + $0x60] sm:$0xff] %v678
    %681 = vst [vmem:[#allocation2 + $0x68] sm:$0xff] %v679
    %682 = vrot.lane.b32.xlu0 %v614, 112
    %v683 = vpop.permute.xlu0 %682
    %684 = vrot.lane.b32.xlu0 %v615, 112
    %v685 = vpop.permute.xlu0 %684
    %v686 = vsel %vm149, %v683, %v685
    %v687 = vsel %vm149, %v685, %v683
    %688 = vst [vmem:[#allocation2 + $0x70] sm:$0xff] %v686
    %689 = vst [vmem:[#allocation2 + $0x78] sm:$0xff] %v687
    %690 = vrot.lane.b32.xlu0 %v642, 112
    %v691 = vpop.permute.xlu0 %690
    %692 = vrot.lane.b32.xlu0 %v643, 112
    %v693 = vpop.permute.xlu0 %692
    %v694 = vsel %vm149, %v691, %v693
    %v695 = vsel %vm149, %v693, %v691
    %696 = vst [vmem:[#allocation2 + $0x80] sm:$0xff] %v694
    %697 = vst [vmem:[#allocation2 + $0x88] sm:$0xff] %v695
    %v698 = vld [vmem:[#allocation2] sm:$0xff]
    %v699 = vld [vmem:[#allocation2 + $0x8] sm:$0xff]
    %v700 = vld [vmem:[#allocation2 + $0x10] sm:$0xff]
    %v701 = vld [vmem:[#allocation2 + $0x18] sm:$0xff]
    %v702 = vld [vmem:[#allocation2 + $0x20] sm:$0xff]
    %v703 = vld [vmem:[#allocation2 + $0x28] sm:$0xff]
    %v704 = vld [vmem:[#allocation2 + $0x30] sm:$0xff]
    %v705 = vld [vmem:[#allocation2 + $0x38] sm:$0xff]
    %v706 = vld [vmem:[#allocation2 + $0x40] sm:$0xff]
    %v707 = vld [vmem:[#allocation2 + $0x48] sm:$0xff]
    %v708 = vld [vmem:[#allocation2 + $0x50] sm:$0xff]
    %v709 = vld [vmem:[#allocation2 + $0x58] sm:$0xff]
    %v710 = vld [vmem:[#allocation2 + $0x60] sm:$0xff]
    %v711 = vld [vmem:[#allocation2 + $0x68] sm:$0xff]
    %v712 = vld [vmem:[#allocation2 + $0x70] sm:$0xff]
    %v713 = vld [vmem:[#allocation2 + $0x78] sm:$0xff]
    %v714 = vld [vmem:[#allocation2 + $0x80] sm:$0xff]
    %v715 = vld [vmem:[#allocation2 + $0x88] sm:$0xff]
    %716 = vmatprep.subr.mxu0 %v699
    %717 = vmatpush1.msra.mxu0 %v698
    %718 = vmatprep.subr.mxu0 %v701
    %719 = vmatpush1.msra.mxu0 %v700
    %720 = vmatprep.subr.mxu0 %v703
    %721 = vmatpush1.msra.mxu0 %v702
    %722 = vmatprep.subr.mxu0 %v705
    %723 = vmatpush1.msra.mxu0 %v704
    %724 = vmatprep.subr.mxu0 %v707
    %725 = vmatpush1.msra.mxu0 %v706
    %726 = vmatprep.subr.mxu0 %v709
    %727 = vmatpush1.msra.mxu0 %v708
    %728 = vmatprep.subr.mxu0 %v711
    %729 = vmatpush1.msra.mxu0 %v710
    %730 = vmatprep.subr.mxu0 %v713
    %731 = vmatpush1.msra.mxu0 %v712
    %732 = vmatprep.subr.mxu0 %v715
    %733 = vmatpush1.msra.mxu0 %v714
    %734 = vmatprep.subr.mxu0 0.0
    %735 = vmatpush1.msra.mxu0 0.0
    %736 = vmatprep.subr.mxu0 0.0
    %737 = vmatpush1.msra.mxu0 0.0
    %738 = vmatprep.subr.mxu0 0.0
    %739 = vmatpush1.msra.mxu0 0.0
    %740 = vmatprep.subr.mxu0 0.0
    %741 = vmatpush1.msra.mxu0 0.0
    %742 = vmatprep.subr.mxu0 0.0
    %743 = vmatpush1.msra.mxu0 0.0
    %744 = vmatprep.subr.mxu0 0.0
    %745 = vmatpush1.msra.mxu0 0.0
    %746 = vmatprep.subr.mxu0 0.0
    %747 = vmatpush1.msra.mxu0 0.0
    %748 = vmatprep.subr.mxu0 0.0
    %749 = vmatpush1.msra.mxu0 0.0
    %750 = vmatprep.subr.mxu0 0.0
    %751 = vmatpush1.msra.mxu0 0.0
    %752 = vmatprep.subr.mxu0 0.0
    %753 = vmatpush1.msra.mxu0 0.0
    %754 = vmatprep.subr.mxu0 0.0
    %755 = vmatpush1.msra.mxu0 0.0
    %756 = vmatprep.subr.mxu0 0.0
    %757 = vmatpush1.msra.mxu0 0.0
    %758 = vmatprep.subr.mxu0 0.0
    %759 = vmatpush1.msra.mxu0 0.0
    %760 = vmatprep.subr.mxu0 0.0
    %761 = vmatpush1.msra.mxu0 0.0
    %762 = vmatprep.subr.mxu0 0.0
    %763 = vmatpush1.msra.mxu0 0.0
    %764 = vmatprep.subr.mxu0 0.0
    %765 = vmatpush1.msra.mxu0 0.0
    %766 = vmatprep.subr.mxu0 0.0
    %767 = vmatpush1.msra.mxu0 0.0
    %768 = vmatprep.subr.mxu0 0.0
    %769 = vmatpush1.msra.mxu0 0.0
    %770 = vmatprep.subr.mxu0 0.0
    %771 = vmatpush1.msra.mxu0 0.0
    %772 = vmatprep.subr.mxu0 0.0
    %773 = vmatpush1.msra.mxu0 0.0
    %774 = vmatprep.subr.mxu0 0.0
    %775 = vmatpush1.msra.mxu0 0.0
    %776 = vmatprep.subr.mxu0 0.0
    %777 = vmatpush1.msra.mxu0 0.0
    %778 = vmatprep.subr.mxu0 0.0
    %779 = vmatpush1.msra.mxu0 0.0
    %780 = vmatprep.mubr.f32.mxu0 0.0
    %781 = vmatmul.mubr.f32.gmra.mrb[0].mxu0 %v366
    %v782 = vpop.f32.mrb[0].mxu0
    %v783 = vadd.f32 %v47, %v782
    %v784 = vpop.f32.mrb[0].mxu0
    %v785 = vadd.f32 %v47, %v784
    %786 = vdwg.mxu0
    %v787 = vadd.f32 %v783, %v441
    %v788 = vadd.f32 %v785, %v442
    %v789 = vmax.f32 %v787, 0.0
    %v790 = vmax.f32 %v788, 0.0
    %791 = vst [vmem:[#allocation6] sm:$0xff] %v789
    %792 = vst [vmem:[#allocation6 + $0x8] sm:$0xff] %v790
    %s793 = scalar_lea.vmem [#allocation3], 16
    %v794 = vld [vmem:[%s793] sm:$0xff]
    %v795 = vld [vmem:[%s793 + $0x8] sm:$0xff]
    %796 = vrot.lane.b32.xlu0 %v794, 113
    %v797 = vpop.permute.xlu0 %796
    %798 = vrot.lane.b32.xlu0 %v795, 113
    %v799 = vpop.permute.xlu0 %798
    %v800 = vsel %vm86, %v797, %v799
    %v801 = vsel %vm86, %v799, %v797
    %802 = vrot.lane.b32.xlu0 %v794, 1
    %v803 = vpop.permute.xlu0 %802
    %804 = vrot.lane.b32.xlu0 %v795, 1
    %v805 = vpop.permute.xlu0 %804
    %v806 = vsel %vm93, %v803, %v805
    %v807 = vsel %vm93, %v805, %v803
    %v808 = vsel %vm76, %v800, %v807
    %v809 = vsel %vm77, %v801, %v806
    %810 = vrot.lane.b32.xlu0 %v794, 15
    %v811 = vpop.permute.xlu0 %810
    %812 = vrot.lane.b32.xlu0 %v795, 15
    %v813 = vpop.permute.xlu0 %812
    %v814 = vsel %vm102, %v811, %v813
    %v815 = vsel %vm102, %v813, %v811
    %816 = vrot.lane.b32.xlu0 %v794, 127
    %v817 = vpop.permute.xlu0 %816
    %818 = vrot.lane.b32.xlu0 %v795, 127
    %v819 = vpop.permute.xlu0 %818
    %v820 = vsel %vm109, %v817, %v819
    %v821 = vsel %vm109, %v819, %v817
    %v822 = vsel %vm78, %v815, %v820
    %v823 = vsel %vm79, %v814, %v821
    %824 = vrot.lane.b32.xlu0 %v808, 16
    %v825 = vpop.permute.xlu0 %824
    %826 = vrot.lane.b32.xlu0 %v809, 16
    %v827 = vpop.permute.xlu0 %826
    %v828 = vsel %vm118, %v825, %v827
    %v829 = vsel %vm118, %v827, %v825
    %830 = vst [vmem:[#allocation2] sm:$0xff] %v829
    %831 = vst [vmem:[#allocation2 + $0x8] sm:$0xff] %v828
    %832 = vrot.lane.b32.xlu0 %v794, 16
    %v833 = vpop.permute.xlu0 %832
    %834 = vrot.lane.b32.xlu0 %v795, 16
    %v835 = vpop.permute.xlu0 %834
    %v836 = vsel %vm118, %v833, %v835
    %v837 = vsel %vm118, %v835, %v833
    %838 = vst [vmem:[#allocation2 + $0x10] sm:$0xff] %v837
    %839 = vst [vmem:[#allocation2 + $0x18] sm:$0xff] %v836
    %840 = vrot.lane.b32.xlu0 %v822, 16
    %v841 = vpop.permute.xlu0 %840
    %842 = vrot.lane.b32.xlu0 %v823, 16
    %v843 = vpop.permute.xlu0 %842
    %v844 = vsel %vm118, %v841, %v843
    %v845 = vsel %vm118, %v843, %v841
    %846 = vst [vmem:[#allocation2 + $0x20] sm:$0xff] %v845
    %847 = vst [vmem:[#allocation2 + $0x28] sm:$0xff] %v844
    %848 = vst [vmem:[#allocation2 + $0x30] sm:$0xff] %v808
    %849 = vst [vmem:[#allocation2 + $0x38] sm:$0xff] %v809
    %850 = vst [vmem:[#allocation2 + $0x40] sm:$0xff] %v794
    %851 = vst [vmem:[#allocation2 + $0x48] sm:$0xff] %v795
    %852 = vst [vmem:[#allocation2 + $0x50] sm:$0xff] %v822
    %853 = vst [vmem:[#allocation2 + $0x58] sm:$0xff] %v823
    %854 = vrot.lane.b32.xlu0 %v808, 112
    %v855 = vpop.permute.xlu0 %854
    %856 = vrot.lane.b32.xlu0 %v809, 112
    %v857 = vpop.permute.xlu0 %856
    %v858 = vsel %vm149, %v855, %v857
    %v859 = vsel %vm149, %v857, %v855
    %860 = vst [vmem:[#allocation2 + $0x60] sm:$0xff] %v858
    %861 = vst [vmem:[#allocation2 + $0x68] sm:$0xff] %v859
    %862 = vrot.lane.b32.xlu0 %v794, 112
    %v863 = vpop.permute.xlu0 %862
    %864 = vrot.lane.b32.xlu0 %v795, 112
    %v865 = vpop.permute.xlu0 %864
    %v866 = vsel %vm149, %v863, %v865
    %v867 = vsel %vm149, %v865, %v863
    %868 = vst [vmem:[#allocation2 + $0x70] sm:$0xff] %v866
    %869 = vst [vmem:[#allocation2 + $0x78] sm:$0xff] %v867
    %870 = vrot.lane.b32.xlu0 %v822, 112
    %v871 = vpop.permute.xlu0 %870
    %872 = vrot.lane.b32.xlu0 %v823, 112
    %v873 = vpop.permute.xlu0 %872
    %v874 = vsel %vm149, %v871, %v873
    %v875 = vsel %vm149, %v873, %v871
    %876 = vst [vmem:[#allocation2 + $0x80] sm:$0xff] %v874
    %877 = vst [vmem:[#allocation2 + $0x88] sm:$0xff] %v875
    %v878 = vld [vmem:[#allocation2] sm:$0xff]
    %v879 = vld [vmem:[#allocation2 + $0x8] sm:$0xff]
    %v880 = vld [vmem:[#allocation2 + $0x10] sm:$0xff]
    %v881 = vld [vmem:[#allocation2 + $0x18] sm:$0xff]
    %v882 = vld [vmem:[#allocation2 + $0x20] sm:$0xff]
    %v883 = vld [vmem:[#allocation2 + $0x28] sm:$0xff]
    %v884 = vld [vmem:[#allocation2 + $0x30] sm:$0xff]
    %v885 = vld [vmem:[#allocation2 + $0x38] sm:$0xff]
    %v886 = vld [vmem:[#allocation2 + $0x40] sm:$0xff]
    %v887 = vld [vmem:[#allocation2 + $0x48] sm:$0xff]
    %v888 = vld [vmem:[#allocation2 + $0x50] sm:$0xff]
    %v889 = vld [vmem:[#allocation2 + $0x58] sm:$0xff]
    %v890 = vld [vmem:[#allocation2 + $0x60] sm:$0xff]
    %v891 = vld [vmem:[#allocation2 + $0x68] sm:$0xff]
    %v892 = vld [vmem:[#allocation2 + $0x70] sm:$0xff]
    %v893 = vld [vmem:[#allocation2 + $0x78] sm:$0xff]
    %v894 = vld [vmem:[#allocation2 + $0x80] sm:$0xff]
    %v895 = vld [vmem:[#allocation2 + $0x88] sm:$0xff]
    %896 = vmatprep.subr.mxu0 %v879
    %897 = vmatpush1.msra.mxu0 %v878
    %898 = vmatprep.subr.mxu0 %v881
    %899 = vmatpush1.msra.mxu0 %v880
    %900 = vmatprep.subr.mxu0 %v883
    %901 = vmatpush1.msra.mxu0 %v882
    %902 = vmatprep.subr.mxu0 %v885
    %903 = vmatpush1.msra.mxu0 %v884
    %904 = vmatprep.subr.mxu0 %v887
    %905 = vmatpush1.msra.mxu0 %v886
    %906 = vmatprep.subr.mxu0 %v889
    %907 = vmatpush1.msra.mxu0 %v888
    %908 = vmatprep.subr.mxu0 %v891
    %909 = vmatpush1.msra.mxu0 %v890
    %910 = vmatprep.subr.mxu0 %v893
    %911 = vmatpush1.msra.mxu0 %v892
    %912 = vmatprep.subr.mxu0 %v895
    %913 = vmatpush1.msra.mxu0 %v894
    %914 = vmatprep.subr.mxu0 0.0
    %915 = vmatpush1.msra.mxu0 0.0
    %916 = vmatprep.subr.mxu0 0.0
    %917 = vmatpush1.msra.mxu0 0.0
    %918 = vmatprep.subr.mxu0 0.0
    %919 = vmatpush1.msra.mxu0 0.0
    %920 = vmatprep.subr.mxu0 0.0
    %921 = vmatpush1.msra.mxu0 0.0
    %922 = vmatprep.subr.mxu0 0.0
    %923 = vmatpush1.msra.mxu0 0.0
    %924 = vmatprep.subr.mxu0 0.0
    %925 = vmatpush1.msra.mxu0 0.0
    %926 = vmatprep.subr.mxu0 0.0
    %927 = vmatpush1.msra.mxu0 0.0
    %928 = vmatprep.subr.mxu0 0.0
    %929 = vmatpush1.msra.mxu0 0.0
    %930 = vmatprep.subr.mxu0 0.0
    %931 = vmatpush1.msra.mxu0 0.0
    %932 = vmatprep.subr.mxu0 0.0
    %933 = vmatpush1.msra.mxu0 0.0
    %934 = vmatprep.subr.mxu0 0.0
    %935 = vmatpush1.msra.mxu0 0.0
    %936 = vmatprep.subr.mxu0 0.0
    %937 = vmatpush1.msra.mxu0 0.0
    %938 = vmatprep.subr.mxu0 0.0
    %939 = vmatpush1.msra.mxu0 0.0
    %940 = vmatprep.subr.mxu0 0.0
    %941 = vmatpush1.msra.mxu0 0.0
    %942 = vmatprep.subr.mxu0 0.0
    %943 = vmatpush1.msra.mxu0 0.0
    %944 = vmatprep.subr.mxu0 0.0
    %945 = vmatpush1.msra.mxu0 0.0
    %946 = vmatprep.subr.mxu0 0.0
    %947 = vmatpush1.msra.mxu0 0.0
    %948 = vmatprep.subr.mxu0 0.0
    %949 = vmatpush1.msra.mxu0 0.0
    %950 = vmatprep.subr.mxu0 0.0
    %951 = vmatpush1.msra.mxu0 0.0
    %952 = vmatprep.subr.mxu0 0.0
    %953 = vmatpush1.msra.mxu0 0.0
    %954 = vmatprep.subr.mxu0 0.0
    %955 = vmatpush1.msra.mxu0 0.0
    %956 = vmatprep.subr.mxu0 0.0
    %957 = vmatpush1.msra.mxu0 0.0
    %958 = vmatprep.subr.mxu0 0.0
    %959 = vmatpush1.msra.mxu0 0.0
    %960 = vmatprep.mubr.f32.mxu0 0.0
    %961 = vmatmul.mubr.f32.gmra.mrb[0].mxu0 %v190
    %v962 = vpop.f32.mrb[0].mxu0
    %v963 = vadd.f32 %v41, %v962
    %v964 = vpop.f32.mrb[0].mxu0
    %v965 = vadd.f32 %v41, %v964
    %966 = vdwg.mxu0
    %v967 = vmax.f32 %v963, 0.0
    %v968 = vmax.f32 %v965, 0.0
    %969 = vrot.lane.b32.xlu0 %v967, 113
    %v970 = vpop.permute.xlu0 %969
    %971 = vrot.lane.b32.xlu0 %v968, 113
    %v972 = vpop.permute.xlu0 %971
    %v973 = vsel %vm86, %v970, %v972
    %v974 = vsel %vm86, %v972, %v970
    %975 = vrot.lane.b32.xlu0 %v967, 1
    %v976 = vpop.permute.xlu0 %975
    %977 = vrot.lane.b32.xlu0 %v968, 1
    %v978 = vpop.permute.xlu0 %977
    %v979 = vsel %vm93, %v976, %v978
    %v980 = vsel %vm93, %v978, %v976
    %v981 = vsel %vm76, %v973, %v980
    %v982 = vsel %vm77, %v974, %v979
    %983 = vrot.lane.b32.xlu0 %v967, 15
    %v984 = vpop.permute.xlu0 %983
    %985 = vrot.lane.b32.xlu0 %v968, 15
    %v986 = vpop.permute.xlu0 %985
    %v987 = vsel %vm102, %v984, %v986
    %v988 = vsel %vm102, %v986, %v984
    %989 = vrot.lane.b32.xlu0 %v967, 127
    %v990 = vpop.permute.xlu0 %989
    %991 = vrot.lane.b32.xlu0 %v968, 127
    %v992 = vpop.permute.xlu0 %991
    %v993 = vsel %vm109, %v990, %v992
    %v994 = vsel %vm109, %v992, %v990
    %v995 = vsel %vm78, %v988, %v993
    %v996 = vsel %vm79, %v987, %v994
    %997 = vrot.lane.b32.xlu0 %v981, 16
    %v998 = vpop.permute.xlu0 %997
    %999 = vrot.lane.b32.xlu0 %v982, 16
    %v1000 = vpop.permute.xlu0 %999
    %v1001 = vsel %vm118, %v998, %v1000
    %v1002 = vsel %vm118, %v1000, %v998
    %1003 = vst [vmem:[#allocation2] sm:$0xff] %v1002
    %1004 = vst [vmem:[#allocation2 + $0x8] sm:$0xff] %v1001
    %1005 = vrot.lane.b32.xlu0 %v967, 16
    %v1006 = vpop.permute.xlu0 %1005
    %1007 = vrot.lane.b32.xlu0 %v968, 16
    %v1008 = vpop.permute.xlu0 %1007
    %v1009 = vsel %vm118, %v1006, %v1008
    %v1010 = vsel %vm118, %v1008, %v1006
    %1011 = vst [vmem:[#allocation2 + $0x10] sm:$0xff] %v1010
    %1012 = vst [vmem:[#allocation2 + $0x18] sm:$0xff] %v1009
    %1013 = vrot.lane.b32.xlu0 %v995, 16
    %v1014 = vpop.permute.xlu0 %1013
    %1015 = vrot.lane.b32.xlu0 %v996, 16
    %v1016 = vpop.permute.xlu0 %1015
    %v1017 = vsel %vm118, %v1014, %v1016
    %v1018 = vsel %vm118, %v1016, %v1014
    %1019 = vst [vmem:[#allocation2 + $0x20] sm:$0xff] %v1018
    %1020 = vst [vmem:[#allocation2 + $0x28] sm:$0xff] %v1017
    %1021 = vst [vmem:[#allocation2 + $0x30] sm:$0xff] %v981
    %1022 = vst [vmem:[#allocation2 + $0x38] sm:$0xff] %v982
    %1023 = vst [vmem:[#allocation2 + $0x40] sm:$0xff] %v967
    %1024 = vst [vmem:[#allocation2 + $0x48] sm:$0xff] %v968
    %1025 = vst [vmem:[#allocation2 + $0x50] sm:$0xff] %v995
    %1026 = vst [vmem:[#allocation2 + $0x58] sm:$0xff] %v996
    %1027 = vrot.lane.b32.xlu0 %v981, 112
    %v1028 = vpop.permute.xlu0 %1027
    %1029 = vrot.lane.b32.xlu0 %v982, 112
    %v1030 = vpop.permute.xlu0 %1029
    %v1031 = vsel %vm149, %v1028, %v1030
    %v1032 = vsel %vm149, %v1030, %v1028
    %1033 = vst [vmem:[#allocation2 + $0x60] sm:$0xff] %v1031
    %1034 = vst [vmem:[#allocation2 + $0x68] sm:$0xff] %v1032
    %1035 = vrot.lane.b32.xlu0 %v967, 112
    %v1036 = vpop.permute.xlu0 %1035
    %1037 = vrot.lane.b32.xlu0 %v968, 112
    %v1038 = vpop.permute.xlu0 %1037
    %v1039 = vsel %vm149, %v1036, %v1038
    %v1040 = vsel %vm149, %v1038, %v1036
    %1041 = vst [vmem:[#allocation2 + $0x70] sm:$0xff] %v1039
    %1042 = vst [vmem:[#allocation2 + $0x78] sm:$0xff] %v1040
    %1043 = vrot.lane.b32.xlu0 %v995, 112
    %v1044 = vpop.permute.xlu0 %1043
    %1045 = vrot.lane.b32.xlu0 %v996, 112
    %v1046 = vpop.permute.xlu0 %1045
    %v1047 = vsel %vm149, %v1044, %v1046
    %v1048 = vsel %vm149, %v1046, %v1044
    %1049 = vst [vmem:[#allocation2 + $0x80] sm:$0xff] %v1047
    %1050 = vst [vmem:[#allocation2 + $0x88] sm:$0xff] %v1048
    %v1051 = vld [vmem:[#allocation2] sm:$0xff]
    %v1052 = vld [vmem:[#allocation2 + $0x8] sm:$0xff]
    %v1053 = vld [vmem:[#allocation2 + $0x10] sm:$0xff]
    %v1054 = vld [vmem:[#allocation2 + $0x18] sm:$0xff]
    %v1055 = vld [vmem:[#allocation2 + $0x20] sm:$0xff]
    %v1056 = vld [vmem:[#allocation2 + $0x28] sm:$0xff]
    %v1057 = vld [vmem:[#allocation2 + $0x30] sm:$0xff]
    %v1058 = vld [vmem:[#allocation2 + $0x38] sm:$0xff]
    %v1059 = vld [vmem:[#allocation2 + $0x40] sm:$0xff]
    %v1060 = vld [vmem:[#allocation2 + $0x48] sm:$0xff]
    %v1061 = vld [vmem:[#allocation2 + $0x50] sm:$0xff]
    %v1062 = vld [vmem:[#allocation2 + $0x58] sm:$0xff]
    %v1063 = vld [vmem:[#allocation2 + $0x60] sm:$0xff]
    %v1064 = vld [vmem:[#allocation2 + $0x68] sm:$0xff]
    %v1065 = vld [vmem:[#allocation2 + $0x70] sm:$0xff]
    %v1066 = vld [vmem:[#allocation2 + $0x78] sm:$0xff]
    %v1067 = vld [vmem:[#allocation2 + $0x80] sm:$0xff]
    %v1068 = vld [vmem:[#allocation2 + $0x88] sm:$0xff]
    %1069 = vmatprep.subr.mxu0 %v1052
    %1070 = vmatpush1.msra.mxu0 %v1051
    %1071 = vmatprep.subr.mxu0 %v1054
    %1072 = vmatpush1.msra.mxu0 %v1053
    %1073 = vmatprep.subr.mxu0 %v1056
    %1074 = vmatpush1.msra.mxu0 %v1055
    %1075 = vmatprep.subr.mxu0 %v1058
    %1076 = vmatpush1.msra.mxu0 %v1057
    %1077 = vmatprep.subr.mxu0 %v1060
    %1078 = vmatpush1.msra.mxu0 %v1059
    %1079 = vmatprep.subr.mxu0 %v1062
    %1080 = vmatpush1.msra.mxu0 %v1061
    %1081 = vmatprep.subr.mxu0 %v1064
    %1082 = vmatpush1.msra.mxu0 %v1063
    %1083 = vmatprep.subr.mxu0 %v1066
    %1084 = vmatpush1.msra.mxu0 %v1065
    %1085 = vmatprep.subr.mxu0 %v1068
    %1086 = vmatpush1.msra.mxu0 %v1067
    %1087 = vmatprep.subr.mxu0 0.0
    %1088 = vmatpush1.msra.mxu0 0.0
    %1089 = vmatprep.subr.mxu0 0.0
    %1090 = vmatpush1.msra.mxu0 0.0
    %1091 = vmatprep.subr.mxu0 0.0
    %1092 = vmatpush1.msra.mxu0 0.0
    %1093 = vmatprep.subr.mxu0 0.0
    %1094 = vmatpush1.msra.mxu0 0.0
    %1095 = vmatprep.subr.mxu0 0.0
    %1096 = vmatpush1.msra.mxu0 0.0
    %1097 = vmatprep.subr.mxu0 0.0
    %1098 = vmatpush1.msra.mxu0 0.0
    %1099 = vmatprep.subr.mxu0 0.0
    %1100 = vmatpush1.msra.mxu0 0.0
    %1101 = vmatprep.subr.mxu0 0.0
    %1102 = vmatpush1.msra.mxu0 0.0
    %1103 = vmatprep.subr.mxu0 0.0
    %1104 = vmatpush1.msra.mxu0 0.0
    %1105 = vmatprep.subr.mxu0 0.0
    %1106 = vmatpush1.msra.mxu0 0.0
    %1107 = vmatprep.subr.mxu0 0.0
    %1108 = vmatpush1.msra.mxu0 0.0
    %1109 = vmatprep.subr.mxu0 0.0
    %1110 = vmatpush1.msra.mxu0 0.0
    %1111 = vmatprep.subr.mxu0 0.0
    %1112 = vmatpush1.msra.mxu0 0.0
    %1113 = vmatprep.subr.mxu0 0.0
    %1114 = vmatpush1.msra.mxu0 0.0
    %1115 = vmatprep.subr.mxu0 0.0
    %1116 = vmatpush1.msra.mxu0 0.0
    %1117 = vmatprep.subr.mxu0 0.0
    %1118 = vmatpush1.msra.mxu0 0.0
    %1119 = vmatprep.subr.mxu0 0.0
    %1120 = vmatpush1.msra.mxu0 0.0
    %1121 = vmatprep.subr.mxu0 0.0
    %1122 = vmatpush1.msra.mxu0 0.0
    %1123 = vmatprep.subr.mxu0 0.0
    %1124 = vmatpush1.msra.mxu0 0.0
    %1125 = vmatprep.subr.mxu0 0.0
    %1126 = vmatpush1.msra.mxu0 0.0
    %1127 = vmatprep.subr.mxu0 0.0
    %1128 = vmatpush1.msra.mxu0 0.0
    %1129 = vmatprep.subr.mxu0 0.0
    %1130 = vmatpush1.msra.mxu0 0.0
    %1131 = vmatprep.subr.mxu0 0.0
    %1132 = vmatpush1.msra.mxu0 0.0
    %1133 = vmatprep.mubr.f32.mxu0 0.0
    %1134 = vmatmul.mubr.f32.gmra.mrb[0].mxu0 %v366
    %v1135 = vpop.f32.mrb[0].mxu0
    %v1136 = vadd.f32 %v47, %v1135
    %v1137 = vpop.f32.mrb[0].mxu0
    %v1138 = vadd.f32 %v47, %v1137
    %1139 = vdwg.mxu0
    %v1140 = vadd.f32 %v1136, %v794
    %v1141 = vadd.f32 %v1138, %v795
    %v1142 = vmax.f32 %v1140, 0.0
    %v1143 = vmax.f32 %v1141, 0.0
    %1144 = vrot.lane.b32.xlu0 %v1142, 113
    %v1145 = vpop.permute.xlu0 %1144
    %1146 = vrot.lane.b32.xlu0 %v1143, 113
    %v1147 = vpop.permute.xlu0 %1146
    %v1148 = vsel %vm86, %v1145, %v1147
    %v1149 = vsel %vm86, %v1147, %v1145
    %1150 = vrot.lane.b32.xlu0 %v1142, 1
    %v1151 = vpop.permute.xlu0 %1150
    %1152 = vrot.lane.b32.xlu0 %v1143, 1
    %v1153 = vpop.permute.xlu0 %1152
    %v1154 = vsel %vm93, %v1151, %v1153
    %v1155 = vsel %vm93, %v1153, %v1151
    %v1156 = vsel %vm76, %v1148, %v1155
    %v1157 = vsel %vm77, %v1149, %v1154
    %1158 = vrot.lane.b32.xlu0 %v1142, 15
    %v1159 = vpop.permute.xlu0 %1158
    %1160 = vrot.lane.b32.xlu0 %v1143, 15
    %v1161 = vpop.permute.xlu0 %1160
    %v1162 = vsel %vm102, %v1159, %v1161
    %v1163 = vsel %vm102, %v1161, %v1159
    %1164 = vrot.lane.b32.xlu0 %v1142, 127
    %v1165 = vpop.permute.xlu0 %1164
    %1166 = vrot.lane.b32.xlu0 %v1143, 127
    %v1167 = vpop.permute.xlu0 %1166
    %v1168 = vsel %vm109, %v1165, %v1167
    %v1169 = vsel %vm109, %v1167, %v1165
    %v1170 = vsel %vm78, %v1163, %v1168
    %v1171 = vsel %vm79, %v1162, %v1169
    %1172 = vrot.lane.b32.xlu0 %v1156, 16
    %v1173 = vpop.permute.xlu0 %1172
    %1174 = vrot.lane.b32.xlu0 %v1157, 16
    %v1175 = vpop.permute.xlu0 %1174
    %v1176 = vsel %vm118, %v1173, %v1175
    %v1177 = vsel %vm118, %v1175, %v1173
    %1178 = vst [vmem:[#allocation2] sm:$0xff] %v1177
    %1179 = vst [vmem:[#allocation2 + $0x8] sm:$0xff] %v1176
    %1180 = vrot.lane.b32.xlu0 %v1142, 16
    %v1181 = vpop.permute.xlu0 %1180
    %1182 = vrot.lane.b32.xlu0 %v1143, 16
    %v1183 = vpop.permute.xlu0 %1182
    %v1184 = vsel %vm118, %v1181, %v1183
    %v1185 = vsel %vm118, %v1183, %v1181
    %1186 = vst [vmem:[#allocation2 + $0x10] sm:$0xff] %v1185
    %1187 = vst [vmem:[#allocation2 + $0x18] sm:$0xff] %v1184
    %1188 = vrot.lane.b32.xlu0 %v1170, 16
    %v1189 = vpop.permute.xlu0 %1188
    %1190 = vrot.lane.b32.xlu0 %v1171, 16
    %v1191 = vpop.permute.xlu0 %1190
    %v1192 = vsel %vm118, %v1189, %v1191
    %v1193 = vsel %vm118, %v1191, %v1189
    %1194 = vst [vmem:[#allocation2 + $0x20] sm:$0xff] %v1193
    %1195 = vst [vmem:[#allocation2 + $0x28] sm:$0xff] %v1192
    %1196 = vst [vmem:[#allocation2 + $0x30] sm:$0xff] %v1156
    %1197 = vst [vmem:[#allocation2 + $0x38] sm:$0xff] %v1157
    %1198 = vst [vmem:[#allocation2 + $0x40] sm:$0xff] %v1142
    %1199 = vst [vmem:[#allocation2 + $0x48] sm:$0xff] %v1143
    %1200 = vst [vmem:[#allocation2 + $0x50] sm:$0xff] %v1170
    %1201 = vst [vmem:[#allocation2 + $0x58] sm:$0xff] %v1171
    %1202 = vrot.lane.b32.xlu0 %v1156, 112
    %v1203 = vpop.permute.xlu0 %1202
    %1204 = vrot.lane.b32.xlu0 %v1157, 112
    %v1205 = vpop.permute.xlu0 %1204
    %v1206 = vsel %vm149, %v1203, %v1205
    %v1207 = vsel %vm149, %v1205, %v1203
    %1208 = vst [vmem:[#allocation2 + $0x60] sm:$0xff] %v1206
    %1209 = vst [vmem:[#allocation2 + $0x68] sm:$0xff] %v1207
    %1210 = vrot.lane.b32.xlu0 %v1142, 112
    %v1211 = vpop.permute.xlu0 %1210
    %1212 = vrot.lane.b32.xlu0 %v1143, 112
    %v1213 = vpop.permute.xlu0 %1212
    %v1214 = vsel %vm149, %v1211, %v1213
    %v1215 = vsel %vm149, %v1213, %v1211
    %1216 = vst [vmem:[#allocation2 + $0x70] sm:$0xff] %v1214
    %1217 = vst [vmem:[#allocation2 + $0x78] sm:$0xff] %v1215
    %1218 = vrot.lane.b32.xlu0 %v1170, 112
    %v1219 = vpop.permute.xlu0 %1218
    %1220 = vrot.lane.b32.xlu0 %v1171, 112
    %v1221 = vpop.permute.xlu0 %1220
    %v1222 = vsel %vm149, %v1219, %v1221
    %v1223 = vsel %vm149, %v1221, %v1219
    %1224 = vst [vmem:[#allocation2 + $0x80] sm:$0xff] %v1222
    %1225 = vst [vmem:[#allocation2 + $0x88] sm:$0xff] %v1223
    %v1226 = vld [vmem:[#allocation2] sm:$0xff]
    %v1227 = vld [vmem:[#allocation2 + $0x8] sm:$0xff]
    %v1228 = vld [vmem:[#allocation2 + $0x10] sm:$0xff]
    %v1229 = vld [vmem:[#allocation2 + $0x18] sm:$0xff]
    %v1230 = vld [vmem:[#allocation2 + $0x20] sm:$0xff]
    %v1231 = vld [vmem:[#allocation2 + $0x28] sm:$0xff]
    %v1232 = vld [vmem:[#allocation2 + $0x30] sm:$0xff]
    %v1233 = vld [vmem:[#allocation2 + $0x38] sm:$0xff]
    %v1234 = vld [vmem:[#allocation2 + $0x40] sm:$0xff]
    %v1235 = vld [vmem:[#allocation2 + $0x48] sm:$0xff]
    %v1236 = vld [vmem:[#allocation2 + $0x50] sm:$0xff]
    %v1237 = vld [vmem:[#allocation2 + $0x58] sm:$0xff]
    %v1238 = vld [vmem:[#allocation2 + $0x60] sm:$0xff]
    %v1239 = vld [vmem:[#allocation2 + $0x68] sm:$0xff]
    %v1240 = vld [vmem:[#allocation2 + $0x70] sm:$0xff]
    %v1241 = vld [vmem:[#allocation2 + $0x78] sm:$0xff]
    %v1242 = vld [vmem:[#allocation2 + $0x80] sm:$0xff]
    %v1243 = vld [vmem:[#allocation2 + $0x88] sm:$0xff]
    %1244 = vmatprep.subr.mxu0 %v1227
    %1245 = vmatpush1.msra.mxu0 %v1226
    %1246 = vmatprep.subr.mxu0 %v1229
    %1247 = vmatpush1.msra.mxu0 %v1228
    %1248 = vmatprep.subr.mxu0 %v1231
    %1249 = vmatpush1.msra.mxu0 %v1230
    %1250 = vmatprep.subr.mxu0 %v1233
    %1251 = vmatpush1.msra.mxu0 %v1232
    %1252 = vmatprep.subr.mxu0 %v1235
    %1253 = vmatpush1.msra.mxu0 %v1234
    %1254 = vmatprep.subr.mxu0 %v1237
    %1255 = vmatpush1.msra.mxu0 %v1236
    %1256 = vmatprep.subr.mxu0 %v1239
    %1257 = vmatpush1.msra.mxu0 %v1238
    %1258 = vmatprep.subr.mxu0 %v1241
    %1259 = vmatpush1.msra.mxu0 %v1240
    %1260 = vmatprep.subr.mxu0 %v1243
    %1261 = vmatpush1.msra.mxu0 %v1242
    %1262 = vmatprep.subr.mxu0 0.0
    %1263 = vmatpush1.msra.mxu0 0.0
    %1264 = vmatprep.subr.mxu0 0.0
    %1265 = vmatpush1.msra.mxu0 0.0
    %1266 = vmatprep.subr.mxu0 0.0
    %1267 = vmatpush1.msra.mxu0 0.0
    %1268 = vmatprep.subr.mxu0 0.0
    %1269 = vmatpush1.msra.mxu0 0.0
    %1270 = vmatprep.subr.mxu0 0.0
    %1271 = vmatpush1.msra.mxu0 0.0
    %1272 = vmatprep.subr.mxu0 0.0
    %1273 = vmatpush1.msra.mxu0 0.0
    %1274 = vmatprep.subr.mxu0 0.0
    %1275 = vmatpush1.msra.mxu0 0.0
    %1276 = vmatprep.subr.mxu0 0.0
    %1277 = vmatpush1.msra.mxu0 0.0
    %1278 = vmatprep.subr.mxu0 0.0
    %1279 = vmatpush1.msra.mxu0 0.0
    %1280 = vmatprep.subr.mxu0 0.0
    %1281 = vmatpush1.msra.mxu0 0.0
    %1282 = vmatprep.subr.mxu0 0.0
    %1283 = vmatpush1.msra.mxu0 0.0
    %1284 = vmatprep.subr.mxu0 0.0
    %1285 = vmatpush1.msra.mxu0 0.0
    %1286 = vmatprep.subr.mxu0 0.0
    %1287 = vmatpush1.msra.mxu0 0.0
    %1288 = vmatprep.subr.mxu0 0.0
    %1289 = vmatpush1.msra.mxu0 0.0
    %1290 = vmatprep.subr.mxu0 0.0
    %1291 = vmatpush1.msra.mxu0 0.0
    %1292 = vmatprep.subr.mxu0 0.0
    %1293 = vmatpush1.msra.mxu0 0.0
    %1294 = vmatprep.subr.mxu0 0.0
    %1295 = vmatpush1.msra.mxu0 0.0
    %1296 = vmatprep.subr.mxu0 0.0
    %1297 = vmatpush1.msra.mxu0 0.0
    %1298 = vmatprep.subr.mxu0 0.0
    %1299 = vmatpush1.msra.mxu0 0.0
    %1300 = vmatprep.subr.mxu0 0.0
    %1301 = vmatpush1.msra.mxu0 0.0
    %1302 = vmatprep.subr.mxu0 0.0
    %1303 = vmatpush1.msra.mxu0 0.0
    %1304 = vmatprep.subr.mxu0 0.0
    %1305 = vmatpush1.msra.mxu0 0.0
    %1306 = vmatprep.subr.mxu0 0.0
    %1307 = vmatpush1.msra.mxu0 0.0
    %1308 = vmatprep.mubr.f32.mxu0 0.0
    %1309 = vmatmul.mubr.f32.gmra.mrb[0].mxu0 %v190
    %v1310 = vpop.f32.mrb[0].mxu0
    %v1311 = vadd.f32 %v41, %v1310
    %v1312 = vpop.f32.mrb[0].mxu0
    %v1313 = vadd.f32 %v41, %v1312
    %1314 = vdwg.mxu0
    %v1315 = vmax.f32 %v1311, 0.0
    %v1316 = vmax.f32 %v1313, 0.0
    %1317 = vrot.lane.b32.xlu0 %v1315, 113
    %v1318 = vpop.permute.xlu0 %1317
    %1319 = vrot.lane.b32.xlu0 %v1316, 113
    %v1320 = vpop.permute.xlu0 %1319
    %v1321 = vsel %vm86, %v1318, %v1320
    %v1322 = vsel %vm86, %v1320, %v1318
    %1323 = vrot.lane.b32.xlu0 %v1315, 1
    %v1324 = vpop.permute.xlu0 %1323
    %1325 = vrot.lane.b32.xlu0 %v1316, 1
    %v1326 = vpop.permute.xlu0 %1325
    %v1327 = vsel %vm93, %v1324, %v1326
    %v1328 = vsel %vm93, %v1326, %v1324
    %v1329 = vsel %vm76, %v1321, %v1328
    %v1330 = vsel %vm77, %v1322, %v1327
    %1331 = vrot.lane.b32.xlu0 %v1315, 15
    %v1332 = vpop.permute.xlu0 %1331
    %1333 = vrot.lane.b32.xlu0 %v1316, 15
    %v1334 = vpop.permute.xlu0 %1333
    %v1335 = vsel %vm102, %v1332, %v1334
    %v1336 = vsel %vm102, %v1334, %v1332
    %1337 = vrot.lane.b32.xlu0 %v1315, 127
    %v1338 = vpop.permute.xlu0 %1337
    %1339 = vrot.lane.b32.xlu0 %v1316, 127
    %v1340 = vpop.permute.xlu0 %1339
    %v1341 = vsel %vm109, %v1338, %v1340
    %v1342 = vsel %vm109, %v1340, %v1338
    %v1343 = vsel %vm78, %v1336, %v1341
    %v1344 = vsel %vm79, %v1335, %v1342
    %1345 = vrot.lane.b32.xlu0 %v1329, 16
    %v1346 = vpop.permute.xlu0 %1345
    %1347 = vrot.lane.b32.xlu0 %v1330, 16
    %v1348 = vpop.permute.xlu0 %1347
    %v1349 = vsel %vm118, %v1346, %v1348
    %v1350 = vsel %vm118, %v1348, %v1346
    %1351 = vst [vmem:[#allocation2] sm:$0xff] %v1350
    %1352 = vst [vmem:[#allocation2 + $0x8] sm:$0xff] %v1349
    %1353 = vrot.lane.b32.xlu0 %v1315, 16
    %v1354 = vpop.permute.xlu0 %1353
    %1355 = vrot.lane.b32.xlu0 %v1316, 16
    %v1356 = vpop.permute.xlu0 %1355
    %v1357 = vsel %vm118, %v1354, %v1356
    %v1358 = vsel %vm118, %v1356, %v1354
    %1359 = vst [vmem:[#allocation2 + $0x10] sm:$0xff] %v1358
    %1360 = vst [vmem:[#allocation2 + $0x18] sm:$0xff] %v1357
    %1361 = vrot.lane.b32.xlu0 %v1343, 16
    %v1362 = vpop.permute.xlu0 %1361
    %1363 = vrot.lane.b32.xlu0 %v1344, 16
    %v1364 = vpop.permute.xlu0 %1363
    %v1365 = vsel %vm118, %v1362, %v1364
    %v1366 = vsel %vm118, %v1364, %v1362
    %1367 = vst [vmem:[#allocation2 + $0x20] sm:$0xff] %v1366
    %1368 = vst [vmem:[#allocation2 + $0x28] sm:$0xff] %v1365
    %1369 = vst [vmem:[#allocation2 + $0x30] sm:$0xff] %v1329
    %1370 = vst [vmem:[#allocation2 + $0x38] sm:$0xff] %v1330
    %1371 = vst [vmem:[#allocation2 + $0x40] sm:$0xff] %v1315
    %1372 = vst [vmem:[#allocation2 + $0x48] sm:$0xff] %v1316
    %1373 = vst [vmem:[#allocation2 + $0x50] sm:$0xff] %v1343
    %1374 = vst [vmem:[#allocation2 + $0x58] sm:$0xff] %v1344
    %1375 = vrot.lane.b32.xlu0 %v1329, 112
    %v1376 = vpop.permute.xlu0 %1375
    %1377 = vrot.lane.b32.xlu0 %v1330, 112
    %v1378 = vpop.permute.xlu0 %1377
    %v1379 = vsel %vm149, %v1376, %v1378
    %v1380 = vsel %vm149, %v1378, %v1376
    %1381 = vst [vmem:[#allocation2 + $0x60] sm:$0xff] %v1379
    %1382 = vst [vmem:[#allocation2 + $0x68] sm:$0xff] %v1380
    %1383 = vrot.lane.b32.xlu0 %v1315, 112
    %v1384 = vpop.permute.xlu0 %1383
    %1385 = vrot.lane.b32.xlu0 %v1316, 112
    %v1386 = vpop.permute.xlu0 %1385
    %v1387 = vsel %vm149, %v1384, %v1386
    %v1388 = vsel %vm149, %v1386, %v1384
    %1389 = vst [vmem:[#allocation2 + $0x70] sm:$0xff] %v1387
    %1390 = vst [vmem:[#allocation2 + $0x78] sm:$0xff] %v1388
    %1391 = vrot.lane.b32.xlu0 %v1343, 112
    %v1392 = vpop.permute.xlu0 %1391
    %1393 = vrot.lane.b32.xlu0 %v1344, 112
    %v1394 = vpop.permute.xlu0 %1393
    %v1395 = vsel %vm149, %v1392, %v1394
    %v1396 = vsel %vm149, %v1394, %v1392
    %1397 = vst [vmem:[#allocation2 + $0x80] sm:$0xff] %v1395
    %1398 = vst [vmem:[#allocation2 + $0x88] sm:$0xff] %v1396
    %v1399 = vld [vmem:[#allocation2] sm:$0xff]
    %v1400 = vld [vmem:[#allocation2 + $0x8] sm:$0xff]
    %v1401 = vld [vmem:[#allocation2 + $0x10] sm:$0xff]
    %v1402 = vld [vmem:[#allocation2 + $0x18] sm:$0xff]
    %v1403 = vld [vmem:[#allocation2 + $0x20] sm:$0xff]
    %v1404 = vld [vmem:[#allocation2 + $0x28] sm:$0xff]
    %v1405 = vld [vmem:[#allocation2 + $0x30] sm:$0xff]
    %v1406 = vld [vmem:[#allocation2 + $0x38] sm:$0xff]
    %v1407 = vld [vmem:[#allocation2 + $0x40] sm:$0xff]
    %v1408 = vld [vmem:[#allocation2 + $0x48] sm:$0xff]
    %v1409 = vld [vmem:[#allocation2 + $0x50] sm:$0xff]
    %v1410 = vld [vmem:[#allocation2 + $0x58] sm:$0xff]
    %v1411 = vld [vmem:[#allocation2 + $0x60] sm:$0xff]
    %v1412 = vld [vmem:[#allocation2 + $0x68] sm:$0xff]
    %v1413 = vld [vmem:[#allocation2 + $0x70] sm:$0xff]
    %v1414 = vld [vmem:[#allocation2 + $0x78] sm:$0xff]
    %v1415 = vld [vmem:[#allocation2 + $0x80] sm:$0xff]
    %v1416 = vld [vmem:[#allocation2 + $0x88] sm:$0xff]
    %1417 = vmatprep.subr.mxu0 %v1400
    %1418 = vmatpush1.msra.mxu0 %v1399
    %1419 = vmatprep.subr.mxu0 %v1402
    %1420 = vmatpush1.msra.mxu0 %v1401
    %1421 = vmatprep.subr.mxu0 %v1404
    %1422 = vmatpush1.msra.mxu0 %v1403
    %1423 = vmatprep.subr.mxu0 %v1406
    %1424 = vmatpush1.msra.mxu0 %v1405
    %1425 = vmatprep.subr.mxu0 %v1408
    %1426 = vmatpush1.msra.mxu0 %v1407
    %1427 = vmatprep.subr.mxu0 %v1410
    %1428 = vmatpush1.msra.mxu0 %v1409
    %1429 = vmatprep.subr.mxu0 %v1412
    %1430 = vmatpush1.msra.mxu0 %v1411
    %1431 = vmatprep.subr.mxu0 %v1414
    %1432 = vmatpush1.msra.mxu0 %v1413
    %1433 = vmatprep.subr.mxu0 %v1416
    %1434 = vmatpush1.msra.mxu0 %v1415
    %1435 = vmatprep.subr.mxu0 0.0
    %1436 = vmatpush1.msra.mxu0 0.0
    %1437 = vmatprep.subr.mxu0 0.0
    %1438 = vmatpush1.msra.mxu0 0.0
    %1439 = vmatprep.subr.mxu0 0.0
    %1440 = vmatpush1.msra.mxu0 0.0
    %1441 = vmatprep.subr.mxu0 0.0
    %1442 = vmatpush1.msra.mxu0 0.0
    %1443 = vmatprep.subr.mxu0 0.0
    %1444 = vmatpush1.msra.mxu0 0.0
    %1445 = vmatprep.subr.mxu0 0.0
    %1446 = vmatpush1.msra.mxu0 0.0
    %1447 = vmatprep.subr.mxu0 0.0
    %1448 = vmatpush1.msra.mxu0 0.0
    %1449 = vmatprep.subr.mxu0 0.0
    %1450 = vmatpush1.msra.mxu0 0.0
    %1451 = vmatprep.subr.mxu0 0.0
    %1452 = vmatpush1.msra.mxu0 0.0
    %1453 = vmatprep.subr.mxu0 0.0
    %1454 = vmatpush1.msra.mxu0 0.0
    %1455 = vmatprep.subr.mxu0 0.0
    %1456 = vmatpush1.msra.mxu0 0.0
    %1457 = vmatprep.subr.mxu0 0.0
    %1458 = vmatpush1.msra.mxu0 0.0
    %1459 = vmatprep.subr.mxu0 0.0
    %1460 = vmatpush1.msra.mxu0 0.0
    %1461 = vmatprep.subr.mxu0 0.0
    %1462 = vmatpush1.msra.mxu0 0.0
    %1463 = vmatprep.subr.mxu0 0.0
    %1464 = vmatpush1.msra.mxu0 0.0
    %1465 = vmatprep.subr.mxu0 0.0
    %1466 = vmatpush1.msra.mxu0 0.0
    %1467 = vmatprep.subr.mxu0 0.0
    %1468 = vmatpush1.msra.mxu0 0.0
    %1469 = vmatprep.subr.mxu0 0.0
    %1470 = vmatpush1.msra.mxu0 0.0
    %1471 = vmatprep.subr.mxu0 0.0
    %1472 = vmatpush1.msra.mxu0 0.0
    %1473 = vmatprep.subr.mxu0 0.0
    %1474 = vmatpush1.msra.mxu0 0.0
    %1475 = vmatprep.subr.mxu0 0.0
    %1476 = vmatpush1.msra.mxu0 0.0
    %1477 = vmatprep.subr.mxu0 0.0
    %1478 = vmatpush1.msra.mxu0 0.0
    %1479 = vmatprep.subr.mxu0 0.0
    %1480 = vmatpush1.msra.mxu0 0.0
    %1481 = vmatprep.mubr.f32.mxu0 0.0
    %1482 = vmatmul.mubr.f32.gmra.mrb[0].mxu0 %v366
    %v1483 = vpop.f32.mrb[0].mxu0
    %v1484 = vadd.f32 %v47, %v1483
    %v1485 = vpop.f32.mrb[0].mxu0
    %v1486 = vadd.f32 %v47, %v1485
    %1487 = vdwg.mxu0
    %v1488 = vadd.f32 %v1484, %v1142
    %v1489 = vadd.f32 %v1486, %v1143
    %v1490 = vmax.f32 %v1488, 0.0
    %v1491 = vmax.f32 %v1489, 0.0
    %s1492 = scalar_lea.vmem [#allocation6], 16
    %1493 = vst [vmem:[%s1492] sm:$0xff] %v1490
    %1494 = vst [vmem:[%s1492 + $0x8] sm:$0xff] %v1491
    // Predicated region
    $region26: #{tpu_custom_call.1} parent=1 // pred_check
      _
    $region27: #{tpu_custom_call.1} parent=1 // pred_check_branch
      %1496 = sbr.rel (0) target = $region29
    $region28: #{tpu_custom_call.1} parent=1 // pred_region
      %s1498 = ssub.s32 512, 512
      %1499 = vsyncadd [#allocation5], %s1498
      %s1500 = sshll.u32 [#allocation6], 4
      %s1501 = int_to_ptr.vmem [resolvable:$true] %s1500
      %1506 = dma.vmem_to_hbm [thread:$0]  %s1501, 512, %s5, [#allocation5], 256, 256, 16
    $region29: #{tpu_custom_call.1} parent=1 // pred_fallthru
      _
    // Predicated region
    $region30: #{tpu_custom_call.1} parent=1 // pred_check
      _
    $region31: #{tpu_custom_call.1} parent=1 // pred_check_branch
      %1508 = sbr.rel (0) target = $region33
    $region32: #{tpu_custom_call.1} parent=1 // pred_region
      %1509 = dma.done [#allocation5], 512
    $region33: #{tpu_custom_call.1} parent=1 // pred_fallthru
      _
    %1510 = vsyncpa [#allocation4], 1
    %1511 = vsyncpa [#allocation5], 1

</llo_original>
